<compile_context>
chip_gen: v7x
topology: tpu7x:2x2x1
jax: 0.10.0
libtpu: 0.0.40
codegen_flags: <defaults>
</compile_context>

<pallas_src>
import jax
import jax.numpy as jnp
from jax.experimental import pallas as pl
from jax.experimental.pallas import tpu as pltpu

LN_EPS = 1e-5   # PyTorch nn.LayerNorm default eps
SUBLANE = 8


def _round_up(x, m):
    return ((x + m - 1) // m) * m


def _layernorm_onepass(x, gamma, beta):
    # One-pass: s1 = sum(x), s2 = sum(x*x); var = E[x^2] - mu^2 (biased, like torch).
    # Clamp var at 0 to protect rsqrt against catastrophic cancellation.
    d = x.shape[-1]
    inv_d = 1.0 / d
    s1 = jnp.sum(x, axis=-1, keepdims=True)
    s2 = jnp.sum(x * x, axis=-1, keepdims=True)
    mu = s1 * inv_d
    var = jnp.maximum(s2 * inv_d - mu * mu, 0.0)
    return (x - mu) * jax.lax.rsqrt(var + LN_EPS) * gamma + beta


def critic_kernel(state_ref, action_ref,
                  w1_ref, b1_ref, g1_ref, be1_ref,
                  w2_ref, b2_ref, g2_ref, be2_ref,
                  wa_ref, ba_ref,
                  wq_ref, bq_ref,
                  q_ref):
    # --- action branch first, on the (idle) MXU: small-K matmul ----------------
    # Issued ahead of the fc1/LN chain so its MXU work hides under the LN reductions.
    ac = jnp.dot(action_ref[...], wa_ref[...],
                 preferred_element_type=jnp.float32) + ba_ref[...]

    # --- fc1 -> LayerNorm -> ReLU ----------------------------------------------
    # K = in_dim is left unpadded; Mosaic masks the contraction remainder.
    x = jnp.dot(state_ref[...], w1_ref[...],
                preferred_element_type=jnp.float32) + b1_ref[...]
    x = _layernorm_onepass(x, g1_ref[...], be1_ref[...])
    x = jnp.maximum(x, 0.0)

    # --- fc2 -> LayerNorm --------------------------------------------------------
    x = jnp.dot(x, w2_ref[...],
                preferred_element_type=jnp.float32) + b2_ref[...]
    x = _layernorm_onepass(x, g2_ref[...], be2_ref[...])

    # --- fuse action branch + ReLU -----------------------------------------------
    x = jnp.maximum(x + ac, 0.0)

    # --- Q head on the MXU (N = 1); store the (tb, 1) column directly -------------
    q_ref[...] = jnp.dot(x, wq_ref[...],
                         preferred_element_type=jnp.float32) + bq_ref[...]


def critic_forward(state, action, params, *, tile_b=1024):
    """state: [B, in_dim] f32, action: [B, n_actions] f32 -> q: [B, 1] f32."""
    B, in_dim = state.shape
    n_actions = action.shape[1]
    fc1 = params["w1"].shape[1]
    fc2 = params["w2"].shape[1]

    # >= 2 tiles (so "parallel" batch tiles can shard across v7x's 2 TCs); tile
    # size chosen to keep padding waste < 8 rows and capped at tile_b rows.
    n_tiles = max(2, pl.cdiv(B, tile_b))
    tb = _round_up(pl.cdiv(B, n_tiles), SUBLANE)
    b_pad = n_tiles * tb

    if b_pad != B:
        state_p = jnp.pad(state, ((0, b_pad - B), (0, 0)))
        action_p = jnp.pad(action, ((0, b_pad - B), (0, 0)))
    else:
        state_p, action_p = state, action

    def row_spec(shape):                        # per-batch-tile operands
        return pl.BlockSpec(shape, lambda i: (i, 0))

    def fix_spec(shape):                        # resident weights / biases / LN params
        return pl.BlockSpec(shape, lambda i: (0, 0))

    q = pl.pallas_call(
        critic_kernel,
        out_shape=jax.ShapeDtypeStruct((b_pad, 1), jnp.float32),
        grid=(n_tiles,),
        in_specs=[
            row_spec((tb, in_dim)),             # state (unpadded K)
            row_spec((tb, n_actions)),          # action
            fix_spec((in_dim, fc1)),            # w1
            fix_spec((1, fc1)),                 # b1
            fix_spec((1, fc1)),                 # gamma1
            fix_spec((1, fc1)),                 # beta1
            fix_spec((fc1, fc2)),               # w2
            fix_spec((1, fc2)),                 # b2
            fix_spec((1, fc2)),                 # gamma2
            fix_spec((1, fc2)),                 # beta2
            fix_spec((n_actions, fc2)),         # wa
            fix_spec((1, fc2)),                 # ba
            fix_spec((fc2, 1)),                 # wq (natural column layout)
            fix_spec((1, 1)),                   # bq
        ],
        out_specs=row_spec((tb, 1)),
        compiler_params=pltpu.CompilerParams(
            dimension_semantics=("parallel",),  # shard batch tiles across TCs (v7x)
        ),
    )(state_p, action_p,
      params["w1"], params["b1"], params["g1"], params["be1"],
      params["w2"], params["b2"], params["g2"], params["be2"],
      params["wa"], params["ba"],
      params["wq"], params["bq"])

    return q[:B]


def init_params(key, in_dim, n_actions, fc1_dims, fc2_dims):
    """Deterministic init mirroring the module's __init__ (uniform bounds).

    PyTorch stores Linear weights as [out, in]; the module uses
    1/sqrt(weight.size(0)) == 1/sqrt(out_features) as the bound.  Weights are
    kept in [in, out] layout for the kernel.
    """
    ks = jax.random.split(key, 8)
    f1 = 1.0 / jnp.sqrt(jnp.float32(fc1_dims))
    f2 = 1.0 / jnp.sqrt(jnp.float32(fc2_dims))
    fa = 1.0 / jnp.sqrt(jnp.float32(fc2_dims))
    fq = 0.003
    u = lambda k, shape, b: jax.random.uniform(k, shape, jnp.float32, -b, b)
    return {
        "w1": u(ks[0], (in_dim, fc1_dims), f1),
        "b1": u(ks[1], (1, fc1_dims), f1),
        "g1": jnp.ones((1, fc1_dims), jnp.float32),    # LayerNorm default gamma
        "be1": jnp.zeros((1, fc1_dims), jnp.float32),  # LayerNorm default beta
        "w2": u(ks[2], (fc1_dims, fc2_dims), f2),
        "b2": u(ks[3], (1, fc2_dims), f2),
        "g2": jnp.ones((1, fc2_dims), jnp.float32),
        "be2": jnp.zeros((1, fc2_dims), jnp.float32),
        "wa": u(ks[4], (n_actions, fc2_dims), fa),
        "ba": u(ks[5], (1, fc2_dims), fa),
        "wq": u(ks[6], (fc2_dims, 1), fq),
        "bq": u(ks[7], (1, 1), fq),
    }


def _layernorm_ref(x, gamma, beta):
    # Two-pass form, matching torch.nn.LayerNorm (biased variance, eps inside sqrt).
    mu = jnp.mean(x, axis=-1, keepdims=True)
    var = jnp.mean((x - mu) * (x - mu), axis=-1, keepdims=True)
    return (x - mu) * jax.lax.rsqrt(var + LN_EPS) * gamma + beta


def critic_forward_ref(state, action, p):
    x = state @ p["w1"] + p["b1"]
    x = _layernorm_ref(x, p["g1"], p["be1"])
    x = jnp.maximum(x, 0.0)
    x = x @ p["w2"] + p["b2"]
    x = _layernorm_ref(x, p["g2"], p["be2"])
    ac = action @ p["wa"] + p["ba"]
    x = jnp.maximum(x + ac, 0.0)
    return x @ p["wq"] + p["bq"]


if __name__ == "__main__":
    # Realistic small DDPG shapes; B=300 exercises the 2-tile grid (tb=152) and
    # the <8-row batch-padding path.
    B, IN_DIM, N_ACTIONS, FC1, FC2 = 300, 16, 4, 128, 128

    key = jax.random.PRNGKey(0)
    k_state, k_action, k_params = jax.random.split(key, 3)
    state = jax.random.normal(k_state, (B, IN_DIM), jnp.float32)
    action = jax.random.normal(k_action, (B, N_ACTIONS), jnp.float32)
    params = init_params(k_params, IN_DIM, N_ACTIONS, FC1, FC2)

    q = jax.block_until_ready(critic_forward(state, action, params))

    q_ref = critic_forward_ref(state, action, params)
    assert q.shape == (B, 1), q.shape
    max_err = float(jnp.max(jnp.abs(q - q_ref)))
    assert jnp.allclose(q, q_ref, atol=2e-5, rtol=1e-5), f"mismatch: {max_err}"

    print("KERNEL_OK")
</pallas_src>

<mosaic_0001>
module attributes {stable_mosaic.version = 11 : i64} {
  func.func @critic_kernel(%arg0: i32, %arg1: memref<152x16xf32, #tpu.memory_space<vmem>>, %arg2: memref<152x4xf32, #tpu.memory_space<vmem>>, %arg3: memref<16x128xf32, #tpu.memory_space<vmem>>, %arg4: memref<1x128xf32, #tpu.memory_space<vmem>>, %arg5: memref<1x128xf32, #tpu.memory_space<vmem>>, %arg6: memref<1x128xf32, #tpu.memory_space<vmem>>, %arg7: memref<128x128xf32, #tpu.memory_space<vmem>>, %arg8: memref<1x128xf32, #tpu.memory_space<vmem>>, %arg9: memref<1x128xf32, #tpu.memory_space<vmem>>, %arg10: memref<1x128xf32, #tpu.memory_space<vmem>>, %arg11: memref<4x128xf32, #tpu.memory_space<vmem>>, %arg12: memref<1x128xf32, #tpu.memory_space<vmem>>, %arg13: memref<128x1xf32, #tpu.memory_space<vmem>>, %arg14: memref<1x1xf32, #tpu.memory_space<vmem>>, %arg15: memref<152x1xf32, #tpu.memory_space<vmem>>) attributes {dimension_semantics = [#tpu.dimension_semantics<parallel>], iteration_bounds = array<i64: 2>, scalar_prefetch = 0 : i64, scratch_operands = 0 : i64, tpu.core_type = #tpu.core_type<tc>, window_params = [{transform_indices = @transform_0, window_bounds = array<i64: 152, 16>}, {transform_indices = @transform_1, window_bounds = array<i64: 152, 4>}, {pipeline_mode = #tpu.pipeline_mode<synchronous>, transform_indices = @transform_2, window_bounds = array<i64: 16, 128>}, {pipeline_mode = #tpu.pipeline_mode<synchronous>, transform_indices = @transform_3, window_bounds = array<i64: 1, 128>}, {pipeline_mode = #tpu.pipeline_mode<synchronous>, transform_indices = @transform_4, window_bounds = array<i64: 1, 128>}, {pipeline_mode = #tpu.pipeline_mode<synchronous>, transform_indices = @transform_5, window_bounds = array<i64: 1, 128>}, {pipeline_mode = #tpu.pipeline_mode<synchronous>, transform_indices = @transform_6, window_bounds = array<i64: 128, 128>}, {pipeline_mode = #tpu.pipeline_mode<synchronous>, transform_indices = @transform_7, window_bounds = array<i64: 1, 128>}, {pipeline_mode = #tpu.pipeline_mode<synchronous>, transform_indices = @transform_8, window_bounds = array<i64: 1, 128>}, {pipeline_mode = #tpu.pipeline_mode<synchronous>, transform_indices = @transform_9, window_bounds = array<i64: 1, 128>}, {pipeline_mode = #tpu.pipeline_mode<synchronous>, transform_indices = @transform_10, window_bounds = array<i64: 4, 128>}, {pipeline_mode = #tpu.pipeline_mode<synchronous>, transform_indices = @transform_11, window_bounds = array<i64: 1, 128>}, {pipeline_mode = #tpu.pipeline_mode<synchronous>, transform_indices = @transform_12, window_bounds = array<i64: 128, 1>}, {pipeline_mode = #tpu.pipeline_mode<synchronous>, transform_indices = @transform_13, window_bounds = array<i64: 1, 1>}, {transform_indices = @transform_14, window_bounds = array<i64: 152, 1>}]} {
    %c0 = arith.constant 0 : index
    %c0_0 = arith.constant 0 : index
    %0 = vector.load %arg2[%c0, %c0_0] : memref<152x4xf32, #tpu.memory_space<vmem>>, vector<152x4xf32>
    %c0_1 = arith.constant 0 : index
    %c0_2 = arith.constant 0 : index
    %1 = vector.load %arg11[%c0_1, %c0_2] : memref<4x128xf32, #tpu.memory_space<vmem>>, vector<4x128xf32>
    %cst = arith.constant dense<0.000000e+00> : vector<152x128xf32>
    %2 = tpu.matmul %0, %1, %cst {dimension_numbers = #tpu.dot_dimension_numbers<[1], [0], [0], [1], [0, 0, 1, 1], [], []>} : vector<152x4xf32>, vector<4x128xf32>, vector<152x128xf32> -> vector<152x128xf32>
    %c0_3 = arith.constant 0 : index
    %c0_4 = arith.constant 0 : index
    %3 = vector.load %arg12[%c0_3, %c0_4] : memref<1x128xf32, #tpu.memory_space<vmem>>, vector<1x128xf32>
    %4 = vector.broadcast %3 : vector<1x128xf32> to vector<152x128xf32>
    %5 = arith.addf %2, %4 : vector<152x128xf32>
    %c0_5 = arith.constant 0 : index
    %c0_6 = arith.constant 0 : index
    %6 = vector.load %arg1[%c0_5, %c0_6] : memref<152x16xf32, #tpu.memory_space<vmem>>, vector<152x16xf32>
    %c0_7 = arith.constant 0 : index
    %c0_8 = arith.constant 0 : index
    %7 = vector.load %arg3[%c0_7, %c0_8] : memref<16x128xf32, #tpu.memory_space<vmem>>, vector<16x128xf32>
    %cst_9 = arith.constant dense<0.000000e+00> : vector<152x128xf32>
    %8 = tpu.matmul %6, %7, %cst_9 {dimension_numbers = #tpu.dot_dimension_numbers<[1], [0], [0], [1], [0, 0, 1, 1], [], []>} : vector<152x16xf32>, vector<16x128xf32>, vector<152x128xf32> -> vector<152x128xf32>
    %c0_10 = arith.constant 0 : index
    %c0_11 = arith.constant 0 : index
    %9 = vector.load %arg4[%c0_10, %c0_11] : memref<1x128xf32, #tpu.memory_space<vmem>>, vector<1x128xf32>
    %10 = vector.broadcast %9 : vector<1x128xf32> to vector<152x128xf32>
    %11 = arith.addf %8, %10 : vector<152x128xf32>
    %c0_12 = arith.constant 0 : index
    %c0_13 = arith.constant 0 : index
    %12 = vector.load %arg5[%c0_12, %c0_13] : memref<1x128xf32, #tpu.memory_space<vmem>>, vector<1x128xf32>
    %c0_14 = arith.constant 0 : index
    %c0_15 = arith.constant 0 : index
    %13 = vector.load %arg6[%c0_14, %c0_15] : memref<1x128xf32, #tpu.memory_space<vmem>>, vector<1x128xf32>
    %cst_16 = arith.constant dense<0.000000e+00> : vector<152xf32>
    %14 = vector.multi_reduction <add>, %11, %cst_16 [1] : vector<152x128xf32> to vector<152xf32>
    %15 = vector.shape_cast %14 : vector<152xf32> to vector<152x1xf32>
    %16 = arith.mulf %11, %11 : vector<152x128xf32>
    %cst_17 = arith.constant dense<0.000000e+00> : vector<152xf32>
    %17 = vector.multi_reduction <add>, %16, %cst_17 [1] : vector<152x128xf32> to vector<152xf32>
    %18 = vector.shape_cast %17 : vector<152xf32> to vector<152x1xf32>
    %cst_18 = arith.constant 7.812500e-03 : f32
    %19 = vector.broadcast %cst_18 : f32 to vector<152x1xf32>
    %20 = arith.mulf %15, %19 : vector<152x1xf32>
    %cst_19 = arith.constant 7.812500e-03 : f32
    %21 = vector.broadcast %cst_19 : f32 to vector<152x1xf32>
    %22 = arith.mulf %18, %21 : vector<152x1xf32>
    %23 = arith.mulf %20, %20 : vector<152x1xf32>
    %24 = arith.subf %22, %23 : vector<152x1xf32>
    %cst_20 = arith.constant 0.000000e+00 : f32
    %25 = vector.broadcast %cst_20 : f32 to vector<152x1xf32>
    %26 = arith.maximumf %24, %25 : vector<152x1xf32>
    %27 = vector.broadcast %20 : vector<152x1xf32> to vector<152x128xf32>
    %28 = arith.subf %11, %27 : vector<152x128xf32>
    %cst_21 = arith.constant 9.99999974E-6 : f32
    %29 = vector.broadcast %cst_21 : f32 to vector<152x1xf32>
    %30 = arith.addf %26, %29 : vector<152x1xf32>
    %31 = math.rsqrt %30 : vector<152x1xf32>
    %32 = vector.broadcast %31 : vector<152x1xf32> to vector<152x128xf32>
    %33 = arith.mulf %28, %32 : vector<152x128xf32>
    %34 = vector.broadcast %12 : vector<1x128xf32> to vector<152x128xf32>
    %35 = arith.mulf %33, %34 : vector<152x128xf32>
    %36 = vector.broadcast %13 : vector<1x128xf32> to vector<152x128xf32>
    %37 = arith.addf %35, %36 : vector<152x128xf32>
    %cst_22 = arith.constant 0.000000e+00 : f32
    %38 = vector.broadcast %cst_22 : f32 to vector<152x128xf32>
    %39 = arith.maximumf %37, %38 : vector<152x128xf32>
    %c0_23 = arith.constant 0 : index
    %c0_24 = arith.constant 0 : index
    %40 = vector.load %arg7[%c0_23, %c0_24] : memref<128x128xf32, #tpu.memory_space<vmem>>, vector<128x128xf32>
    %cst_25 = arith.constant dense<0.000000e+00> : vector<152x128xf32>
    %41 = tpu.matmul %39, %40, %cst_25 {dimension_numbers = #tpu.dot_dimension_numbers<[1], [0], [0], [1], [0, 0, 1, 1], [], []>} : vector<152x128xf32>, vector<128x128xf32>, vector<152x128xf32> -> vector<152x128xf32>
    %c0_26 = arith.constant 0 : index
    %c0_27 = arith.constant 0 : index
    %42 = vector.load %arg8[%c0_26, %c0_27] : memref<1x128xf32, #tpu.memory_space<vmem>>, vector<1x128xf32>
    %43 = vector.broadcast %42 : vector<1x128xf32> to vector<152x128xf32>
    %44 = arith.addf %41, %43 : vector<152x128xf32>
    %c0_28 = arith.constant 0 : index
    %c0_29 = arith.constant 0 : index
    %45 = vector.load %arg9[%c0_28, %c0_29] : memref<1x128xf32, #tpu.memory_space<vmem>>, vector<1x128xf32>
    %c0_30 = arith.constant 0 : index
    %c0_31 = arith.constant 0 : index
    %46 = vector.load %arg10[%c0_30, %c0_31] : memref<1x128xf32, #tpu.memory_space<vmem>>, vector<1x128xf32>
    %cst_32 = arith.constant dense<0.000000e+00> : vector<152xf32>
    %47 = vector.multi_reduction <add>, %44, %cst_32 [1] : vector<152x128xf32> to vector<152xf32>
    %48 = vector.shape_cast %47 : vector<152xf32> to vector<152x1xf32>
    %49 = arith.mulf %44, %44 : vector<152x128xf32>
    %cst_33 = arith.constant dense<0.000000e+00> : vector<152xf32>
    %50 = vector.multi_reduction <add>, %49, %cst_33 [1] : vector<152x128xf32> to vector<152xf32>
    %51 = vector.shape_cast %50 : vector<152xf32> to vector<152x1xf32>
    %cst_34 = arith.constant 7.812500e-03 : f32
    %52 = vector.broadcast %cst_34 : f32 to vector<152x1xf32>
    %53 = arith.mulf %48, %52 : vector<152x1xf32>
    %cst_35 = arith.constant 7.812500e-03 : f32
    %54 = vector.broadcast %cst_35 : f32 to vector<152x1xf32>
    %55 = arith.mulf %51, %54 : vector<152x1xf32>
    %56 = arith.mulf %53, %53 : vector<152x1xf32>
    %57 = arith.subf %55, %56 : vector<152x1xf32>
    %cst_36 = arith.constant 0.000000e+00 : f32
    %58 = vector.broadcast %cst_36 : f32 to vector<152x1xf32>
    %59 = arith.maximumf %57, %58 : vector<152x1xf32>
    %60 = vector.broadcast %53 : vector<152x1xf32> to vector<152x128xf32>
    %61 = arith.subf %44, %60 : vector<152x128xf32>
    %cst_37 = arith.constant 9.99999974E-6 : f32
    %62 = vector.broadcast %cst_37 : f32 to vector<152x1xf32>
    %63 = arith.addf %59, %62 : vector<152x1xf32>
    %64 = math.rsqrt %63 : vector<152x1xf32>
    %65 = vector.broadcast %64 : vector<152x1xf32> to vector<152x128xf32>
    %66 = arith.mulf %61, %65 : vector<152x128xf32>
    %67 = vector.broadcast %45 : vector<1x128xf32> to vector<152x128xf32>
    %68 = arith.mulf %66, %67 : vector<152x128xf32>
    %69 = vector.broadcast %46 : vector<1x128xf32> to vector<152x128xf32>
    %70 = arith.addf %68, %69 : vector<152x128xf32>
    %71 = arith.addf %70, %5 : vector<152x128xf32>
    %cst_38 = arith.constant 0.000000e+00 : f32
    %72 = vector.broadcast %cst_38 : f32 to vector<152x128xf32>
    %73 = arith.maximumf %71, %72 : vector<152x128xf32>
    %c0_39 = arith.constant 0 : index
    %c0_40 = arith.constant 0 : index
    %74 = vector.load %arg13[%c0_39, %c0_40] : memref<128x1xf32, #tpu.memory_space<vmem>>, vector<128x1xf32>
    %cst_41 = arith.constant dense<0.000000e+00> : vector<152x1xf32>
    %75 = tpu.matmul %73, %74, %cst_41 {dimension_numbers = #tpu.dot_dimension_numbers<[1], [0], [0], [1], [0, 0, 1, 1], [], []>} : vector<152x128xf32>, vector<128x1xf32>, vector<152x1xf32> -> vector<152x1xf32>
    %c0_42 = arith.constant 0 : index
    %c0_43 = arith.constant 0 : index
    %76 = vector.load %arg14[%c0_42, %c0_43] : memref<1x1xf32, #tpu.memory_space<vmem>>, vector<1x1xf32>
    %77 = vector.broadcast %76 : vector<1x1xf32> to vector<152x1xf32>
    %78 = arith.addf %75, %77 : vector<152x1xf32>
    %c0_44 = arith.constant 0 : index
    %c0_45 = arith.constant 0 : index
    %79 = vector.load %arg15[%c0_44, %c0_45] : memref<152x1xf32, #tpu.memory_space<vmem>>, vector<152x1xf32>
    tpu.vector_store %arg15[%c0_44, %c0_45], %78 {strides = array<i32>} : memref<152x1xf32, #tpu.memory_space<vmem>>, vector<152x1xf32>,
    return
  }
  func.func @transform_0(%arg0: i32) -> (i32, i32) {
    %c0_i32 = arith.constant 0 : i32
    %c0_i32_0 = arith.constant 0 : i32
    return %arg0, %c0_i32 : i32, i32
  }
  func.func @transform_1(%arg0: i32) -> (i32, i32) {
    %c0_i32 = arith.constant 0 : i32
    %c0_i32_0 = arith.constant 0 : i32
    return %arg0, %c0_i32 : i32, i32
  }
  func.func @transform_2(%arg0: i32) -> (i32, i32) {
    %c0_i32 = arith.constant 0 : i32
    %c0_i32_0 = arith.constant 0 : i32
    %c0_i32_1 = arith.constant 0 : i32
    return %c0_i32, %c0_i32_0 : i32, i32
  }
  func.func @transform_3(%arg0: i32) -> (i32, i32) {
    %c0_i32 = arith.constant 0 : i32
    %c0_i32_0 = arith.constant 0 : i32
    %c0_i32_1 = arith.constant 0 : i32
    return %c0_i32, %c0_i32_0 : i32, i32
  }
  func.func @transform_4(%arg0: i32) -> (i32, i32) {
    %c0_i32 = arith.constant 0 : i32
    %c0_i32_0 = arith.constant 0 : i32
    %c0_i32_1 = arith.constant 0 : i32
    return %c0_i32, %c0_i32_0 : i32, i32
  }
  func.func @transform_5(%arg0: i32) -> (i32, i32) {
    %c0_i32 = arith.constant 0 : i32
    %c0_i32_0 = arith.constant 0 : i32
    %c0_i32_1 = arith.constant 0 : i32
    return %c0_i32, %c0_i32_0 : i32, i32
  }
  func.func @transform_6(%arg0: i32) -> (i32, i32) {
    %c0_i32 = arith.constant 0 : i32
    %c0_i32_0 = arith.constant 0 : i32
    %c0_i32_1 = arith.constant 0 : i32
    return %c0_i32, %c0_i32_0 : i32, i32
  }
  func.func @transform_7(%arg0: i32) -> (i32, i32) {
    %c0_i32 = arith.constant 0 : i32
    %c0_i32_0 = arith.constant 0 : i32
    %c0_i32_1 = arith.constant 0 : i32
    return %c0_i32, %c0_i32_0 : i32, i32
  }
  func.func @transform_8(%arg0: i32) -> (i32, i32) {
    %c0_i32 = arith.constant 0 : i32
    %c0_i32_0 = arith.constant 0 : i32
    %c0_i32_1 = arith.constant 0 : i32
    return %c0_i32, %c0_i32_0 : i32, i32
  }
  func.func @transform_9(%arg0: i32) -> (i32, i32) {
    %c0_i32 = arith.constant 0 : i32
    %c0_i32_0 = arith.constant 0 : i32
    %c0_i32_1 = arith.constant 0 : i32
    return %c0_i32, %c0_i32_0 : i32, i32
  }
  func.func @transform_10(%arg0: i32) -> (i32, i32) {
    %c0_i32 = arith.constant 0 : i32
    %c0_i32_0 = arith.constant 0 : i32
    %c0_i32_1 = arith.constant 0 : i32
    return %c0_i32, %c0_i32_0 : i32, i32
  }
  func.func @transform_11(%arg0: i32) -> (i32, i32) {
    %c0_i32 = arith.constant 0 : i32
    %c0_i32_0 = arith.constant 0 : i32
    %c0_i32_1 = arith.constant 0 : i32
    return %c0_i32, %c0_i32_0 : i32, i32
  }
  func.func @transform_12(%arg0: i32) -> (i32, i32) {
    %c0_i32 = arith.constant 0 : i32
    %c0_i32_0 = arith.constant 0 : i32
    %c0_i32_1 = arith.constant 0 : i32
    return %c0_i32, %c0_i32_0 : i32, i32
  }
  func.func @transform_13(%arg0: i32) -> (i32, i32) {
    %c0_i32 = arith.constant 0 : i32
    %c0_i32_0 = arith.constant 0 : i32
    %c0_i32_1 = arith.constant 0 : i32
    return %c0_i32, %c0_i32_0 : i32, i32
  }
  func.func @transform_14(%arg0: i32) -> (i32, i32) {
    %c0_i32 = arith.constant 0 : i32
    %c0_i32_0 = arith.constant 0 : i32
    return %arg0, %c0_i32 : i32, i32
  }
}

</mosaic_0001>

<llo_original>
// kernel: tpu_custom_call.1
$region0: #{tpu_custom_call.1}
  #allocation0 [shape = 'u32[]', space=smem, size = 0x4, offset = 0x4, fixed_abs, tag = 'smem constant byte address 0x4 - core index']
  #allocation1 [shape = 'u32[144,128]{1,0:T(1,128)}', space=vmem, size = 0x12000, scoped, tag = 'internal scratch']
  #allocation2 [shape = 'f32[1,1]{1,0:T(1,128)S(1)}', space=vmem, size = 0x200, scoped, tag = 'scoped memory for tpu_custom_call.1']
  %s0 = inlined_call_operand.vmem [shape: f32[304,16], index: 0, kind: input, shape index: {}]
  %s1 = inlined_call_operand.vmem [shape: f32[304,4], index: 1, kind: input, shape index: {}]
  %s2 = inlined_call_operand.vmem [shape: f32[16,128], index: 2, kind: input, shape index: {}]
  %s3 = inlined_call_operand.vmem [shape: f32[1,128], index: 3, kind: input, shape index: {}]
  %s4 = inlined_call_operand.vmem [shape: f32[1,128], index: 4, kind: input, shape index: {}]
  %s5 = inlined_call_operand.vmem [shape: f32[1,128], index: 5, kind: input, shape index: {}]
  %s6 = inlined_call_operand.vmem [shape: f32[128,128], index: 6, kind: input, shape index: {}]
  %s7 = inlined_call_operand.vmem [shape: f32[1,128], index: 7, kind: input, shape index: {}]
  %s8 = inlined_call_operand.vmem [shape: f32[1,128], index: 8, kind: input, shape index: {}]
  %s9 = inlined_call_operand.vmem [shape: f32[1,128], index: 9, kind: input, shape index: {}]
  %s10 = inlined_call_operand.vmem [shape: f32[4,128], index: 10, kind: input, shape index: {}]
  %s11 = inlined_call_operand.vmem [shape: f32[1,128], index: 11, kind: input, shape index: {}]
  %s12 = inlined_call_operand.vmem [shape: f32[128,1], index: 12, kind: input, shape index: {}]
  %s13 = inlined_call_operand.<no memory space> [shape: f32[1,1], index: 13, kind: input, shape index: {}]
  %s14 = inlined_call_operand.vmem [shape: f32[304,1], index: 14, kind: output, shape index: {}]
  %s15 = sld [smem:[#allocation0]]
  $region89: #{tpu_custom_call.1} parent=0
    _
  %s17 = ssub.s32 1, %s15
  %s18 = scalar_select 0, %s17, %s15
  %v19 = vstv %s13
  %20 = vst [vmem:[#allocation2] sm:$0x1] %v19
  loop: start=0, step=1, limit=4
  $region2: #{tpu_custom_call.1} parent=0 // loop_pre_header
    _
  $region3: #{tpu_custom_call.1} parent=0 // loop_header
    %s22 = sphi 0, %s26
    %p23 = scmp.ge.s32.totalorder %s22, 4
    %s32 = sphi 0, %s34
    %s35 = sphi 0, %s32
    %s36 = sphi 0, %s35
    %s52 = sphi 0, %s36
    %s58 = sphi 0, %s60
    %s61 = sphi 0, %s58
    %s62 = sphi 0, %s61
    %s78 = sphi 0, %s62
    %s82 = sphi 0, %s82
    %s84 = sphi 0, %s82
    %s85 = sphi 0, %s84
    %s99 = sphi 0, %s85
    %s103 = sphi 0, %s103
    %s105 = sphi 0, %s103
    %s106 = sphi 0, %s105
    %s120 = sphi 0, %s106
    %s124 = sphi 0, %s124
    %s126 = sphi 0, %s124
    %s127 = sphi 0, %s126
    %s141 = sphi 0, %s127
    %s145 = sphi 0, %s145
    %s147 = sphi 0, %s145
    %s148 = sphi 0, %s147
    %s162 = sphi 0, %s148
    %s166 = sphi 0, %s166
    %s168 = sphi 0, %s166
    %s169 = sphi 0, %s168
    %s183 = sphi 0, %s169
    %s187 = sphi 0, %s187
    %s189 = sphi 0, %s187
    %s190 = sphi 0, %s189
    %s204 = sphi 0, %s190
    %s208 = sphi 0, %s208
    %s210 = sphi 0, %s208
    %s211 = sphi 0, %s210
    %s225 = sphi 0, %s211
    %s229 = sphi 0, %s229
    %s231 = sphi 0, %s229
    %s232 = sphi 0, %s231
    %s246 = sphi 0, %s232
    %s250 = sphi 0, %s250
    %s252 = sphi 0, %s250
    %s253 = sphi 0, %s252
    %s267 = sphi 0, %s253
    %s271 = sphi 0, %s271
    %s273 = sphi 0, %s271
    %s274 = sphi 0, %s273
    %s288 = sphi 0, %s274
    %s292 = sphi 0, %s292
    %s294 = sphi 0, %s292
    %s295 = sphi 0, %s294
    %s309 = sphi 0, %s295
    %s313 = sphi 0, %s313
    %s315 = sphi 0, %s313
    %s316 = sphi 0, %s315
    %s330 = sphi 0, %s316
    %s336 = sphi 0, %s338
    %s339 = sphi 0, %s336
    %s340 = sphi 0, %s339
    %s356 = sphi 0, %s340
  $region4: #{tpu_custom_call.1} parent=0 // loop_header_branch
    %25 = sbr.rel (%p23) target = $region8
  $region5: #{tpu_custom_call.1} parent=0 // loop_body
    %s27 = ssub.s32 %s22, 1
    %s28 = ssub.s32 %s22, 2
    %s29 = sadd.s32 %s22, 1
    %s30 = ssub.s32 %s22, %s29
    %p31 = scmp.eq.s32.totalorder %s30, 0
    %s33 = sadd.s32 %s32, 1
    %s34 = scalar_select %p31, %s32, %s33
    %p37 = pneg %p31
    %p38 = scmp.eq.s32.totalorder %s22, 1
    %p39 = por %p37, %p38
    %p40 = scmp.ne.s32.totalorder %s32, %s35
    %p41 = scmp.eq.s32.totalorder %s22, 0
    %p42 = por %p40, %p41
    %p43 = scmp.ne.s32.totalorder %s32, %s35
    %p44 = scmp.eq.s32.totalorder %s27, 1
    %p45 = por %p43, %p44
    %p46 = scmp.ne.s32.totalorder %s35, %s36
    %p47 = scmp.eq.s32.totalorder %s27, 0
    %p48 = por %p46, %p47
    %p49 = scmp.ne.s32.totalorder %s35, %s36
    %p50 = scmp.eq.s32.totalorder %s28, 1
    %p51 = por %p49, %p50
    %p53 = scmp.ne.s32.totalorder %s36, %s52
    %p54 = scmp.eq.s32.totalorder %s28, 0
    %p55 = por %p53, %p54
    %s56 = ssub.s32 %s22, %s29
    %p57 = scmp.eq.s32.totalorder %s56, 0
    %s59 = sadd.s32 %s58, 1
    %s60 = scalar_select %p57, %s58, %s59
    %p63 = pneg %p57
    %p64 = scmp.eq.s32.totalorder %s22, 1
    %p65 = por %p63, %p64
    %p66 = scmp.ne.s32.totalorder %s58, %s61
    %p67 = scmp.eq.s32.totalorder %s22, 0
    %p68 = por %p66, %p67
    %p69 = scmp.ne.s32.totalorder %s58, %s61
    %p70 = scmp.eq.s32.totalorder %s27, 1
    %p71 = por %p69, %p70
    %p72 = scmp.ne.s32.totalorder %s61, %s62
    %p73 = scmp.eq.s32.totalorder %s27, 0
    %p74 = por %p72, %p73
    %p75 = scmp.ne.s32.totalorder %s61, %s62
    %p76 = scmp.eq.s32.totalorder %s28, 1
    %p77 = por %p75, %p76
    %p79 = scmp.ne.s32.totalorder %s62, %s78
    %p80 = scmp.eq.s32.totalorder %s28, 0
    %p81 = por %p79, %p80
    %s83 = sadd.s32 %s82, 1
    %p86 = scmp.eq.s32.totalorder %s22, 1
    %p87 = scmp.ne.s32.totalorder %s82, %s84
    %p88 = scmp.eq.s32.totalorder %s22, 0
    %p89 = por %p87, %p88
    %p90 = scmp.ne.s32.totalorder %s82, %s84
    %p91 = scmp.eq.s32.totalorder %s27, 1
    %p92 = por %p90, %p91
    %p93 = scmp.ne.s32.totalorder %s84, %s85
    %p94 = scmp.eq.s32.totalorder %s27, 0
    %p95 = por %p93, %p94
    %p96 = scmp.ne.s32.totalorder %s84, %s85
    %p97 = scmp.eq.s32.totalorder %s28, 1
    %p98 = por %p96, %p97
    %p100 = scmp.ne.s32.totalorder %s85, %s99
    %p101 = scmp.eq.s32.totalorder %s28, 0
    %p102 = por %p100, %p101
    %s104 = sadd.s32 %s103, 1
    %p107 = scmp.eq.s32.totalorder %s22, 1
    %p108 = scmp.ne.s32.totalorder %s103, %s105
    %p109 = scmp.eq.s32.totalorder %s22, 0
    %p110 = por %p108, %p109
    %p111 = scmp.ne.s32.totalorder %s103, %s105
    %p112 = scmp.eq.s32.totalorder %s27, 1
    %p113 = por %p111, %p112
    %p114 = scmp.ne.s32.totalorder %s105, %s106
    %p115 = scmp.eq.s32.totalorder %s27, 0
    %p116 = por %p114, %p115
    %p117 = scmp.ne.s32.totalorder %s105, %s106
    %p118 = scmp.eq.s32.totalorder %s28, 1
    %p119 = por %p117, %p118
    %p121 = scmp.ne.s32.totalorder %s106, %s120
    %p122 = scmp.eq.s32.totalorder %s28, 0
    %p123 = por %p121, %p122
    %s125 = sadd.s32 %s124, 1
    %p128 = scmp.eq.s32.totalorder %s22, 1
    %p129 = scmp.ne.s32.totalorder %s124, %s126
    %p130 = scmp.eq.s32.totalorder %s22, 0
    %p131 = por %p129, %p130
    %p132 = scmp.ne.s32.totalorder %s124, %s126
    %p133 = scmp.eq.s32.totalorder %s27, 1
    %p134 = por %p132, %p133
    %p135 = scmp.ne.s32.totalorder %s126, %s127
    %p136 = scmp.eq.s32.totalorder %s27, 0
    %p137 = por %p135, %p136
    %p138 = scmp.ne.s32.totalorder %s126, %s127
    %p139 = scmp.eq.s32.totalorder %s28, 1
    %p140 = por %p138, %p139
    %p142 = scmp.ne.s32.totalorder %s127, %s141
    %p143 = scmp.eq.s32.totalorder %s28, 0
    %p144 = por %p142, %p143
    %s146 = sadd.s32 %s145, 1
    %p149 = scmp.eq.s32.totalorder %s22, 1
    %p150 = scmp.ne.s32.totalorder %s145, %s147
    %p151 = scmp.eq.s32.totalorder %s22, 0
    %p152 = por %p150, %p151
    %p153 = scmp.ne.s32.totalorder %s145, %s147
    %p154 = scmp.eq.s32.totalorder %s27, 1
    %p155 = por %p153, %p154
    %p156 = scmp.ne.s32.totalorder %s147, %s148
    %p157 = scmp.eq.s32.totalorder %s27, 0
    %p158 = por %p156, %p157
    %p159 = scmp.ne.s32.totalorder %s147, %s148
    %p160 = scmp.eq.s32.totalorder %s28, 1
    %p161 = por %p159, %p160
    %p163 = scmp.ne.s32.totalorder %s148, %s162
    %p164 = scmp.eq.s32.totalorder %s28, 0
    %p165 = por %p163, %p164
    %s167 = sadd.s32 %s166, 1
    %p170 = scmp.eq.s32.totalorder %s22, 1
    %p171 = scmp.ne.s32.totalorder %s166, %s168
    %p172 = scmp.eq.s32.totalorder %s22, 0
    %p173 = por %p171, %p172
    %p174 = scmp.ne.s32.totalorder %s166, %s168
    %p175 = scmp.eq.s32.totalorder %s27, 1
    %p176 = por %p174, %p175
    %p177 = scmp.ne.s32.totalorder %s168, %s169
    %p178 = scmp.eq.s32.totalorder %s27, 0
    %p179 = por %p177, %p178
    %p180 = scmp.ne.s32.totalorder %s168, %s169
    %p181 = scmp.eq.s32.totalorder %s28, 1
    %p182 = por %p180, %p181
    %p184 = scmp.ne.s32.totalorder %s169, %s183
    %p185 = scmp.eq.s32.totalorder %s28, 0
    %p186 = por %p184, %p185
    %s188 = sadd.s32 %s187, 1
    %p191 = scmp.eq.s32.totalorder %s22, 1
    %p192 = scmp.ne.s32.totalorder %s187, %s189
    %p193 = scmp.eq.s32.totalorder %s22, 0
    %p194 = por %p192, %p193
    %p195 = scmp.ne.s32.totalorder %s187, %s189
    %p196 = scmp.eq.s32.totalorder %s27, 1
    %p197 = por %p195, %p196
    %p198 = scmp.ne.s32.totalorder %s189, %s190
    %p199 = scmp.eq.s32.totalorder %s27, 0
    %p200 = por %p198, %p199
    %p201 = scmp.ne.s32.totalorder %s189, %s190
    %p202 = scmp.eq.s32.totalorder %s28, 1
    %p203 = por %p201, %p202
    %p205 = scmp.ne.s32.totalorder %s190, %s204
    %p206 = scmp.eq.s32.totalorder %s28, 0
    %p207 = por %p205, %p206
    %s209 = sadd.s32 %s208, 1
    %p212 = scmp.eq.s32.totalorder %s22, 1
    %p213 = scmp.ne.s32.totalorder %s208, %s210
    %p214 = scmp.eq.s32.totalorder %s22, 0
    %p215 = por %p213, %p214
    %p216 = scmp.ne.s32.totalorder %s208, %s210
    %p217 = scmp.eq.s32.totalorder %s27, 1
    %p218 = por %p216, %p217
    %p219 = scmp.ne.s32.totalorder %s210, %s211
    %p220 = scmp.eq.s32.totalorder %s27, 0
    %p221 = por %p219, %p220
    %p222 = scmp.ne.s32.totalorder %s210, %s211
    %p223 = scmp.eq.s32.totalorder %s28, 1
    %p224 = por %p222, %p223
    %p226 = scmp.ne.s32.totalorder %s211, %s225
    %p227 = scmp.eq.s32.totalorder %s28, 0
    %p228 = por %p226, %p227
    %s230 = sadd.s32 %s229, 1
    %p233 = scmp.eq.s32.totalorder %s22, 1
    %p234 = scmp.ne.s32.totalorder %s229, %s231
    %p235 = scmp.eq.s32.totalorder %s22, 0
    %p236 = por %p234, %p235
    %p237 = scmp.ne.s32.totalorder %s229, %s231
    %p238 = scmp.eq.s32.totalorder %s27, 1
    %p239 = por %p237, %p238
    %p240 = scmp.ne.s32.totalorder %s231, %s232
    %p241 = scmp.eq.s32.totalorder %s27, 0
    %p242 = por %p240, %p241
    %p243 = scmp.ne.s32.totalorder %s231, %s232
    %p244 = scmp.eq.s32.totalorder %s28, 1
    %p245 = por %p243, %p244
    %p247 = scmp.ne.s32.totalorder %s232, %s246
    %p248 = scmp.eq.s32.totalorder %s28, 0
    %p249 = por %p247, %p248
    %s251 = sadd.s32 %s250, 1
    %p254 = scmp.eq.s32.totalorder %s22, 1
    %p255 = scmp.ne.s32.totalorder %s250, %s252
    %p256 = scmp.eq.s32.totalorder %s22, 0
    %p257 = por %p255, %p256
    %p258 = scmp.ne.s32.totalorder %s250, %s252
    %p259 = scmp.eq.s32.totalorder %s27, 1
    %p260 = por %p258, %p259
    %p261 = scmp.ne.s32.totalorder %s252, %s253
    %p262 = scmp.eq.s32.totalorder %s27, 0
    %p263 = por %p261, %p262
    %p264 = scmp.ne.s32.totalorder %s252, %s253
    %p265 = scmp.eq.s32.totalorder %s28, 1
    %p266 = por %p264, %p265
    %p268 = scmp.ne.s32.totalorder %s253, %s267
    %p269 = scmp.eq.s32.totalorder %s28, 0
    %p270 = por %p268, %p269
    %s272 = sadd.s32 %s271, 1
    %p275 = scmp.eq.s32.totalorder %s22, 1
    %p276 = scmp.ne.s32.totalorder %s271, %s273
    %p277 = scmp.eq.s32.totalorder %s22, 0
    %p278 = por %p276, %p277
    %p279 = scmp.ne.s32.totalorder %s271, %s273
    %p280 = scmp.eq.s32.totalorder %s27, 1
    %p281 = por %p279, %p280
    %p282 = scmp.ne.s32.totalorder %s273, %s274
    %p283 = scmp.eq.s32.totalorder %s27, 0
    %p284 = por %p282, %p283
    %p285 = scmp.ne.s32.totalorder %s273, %s274
    %p286 = scmp.eq.s32.totalorder %s28, 1
    %p287 = por %p285, %p286
    %p289 = scmp.ne.s32.totalorder %s274, %s288
    %p290 = scmp.eq.s32.totalorder %s28, 0
    %p291 = por %p289, %p290
    %s293 = sadd.s32 %s292, 1
    %p296 = scmp.eq.s32.totalorder %s22, 1
    %p297 = scmp.ne.s32.totalorder %s292, %s294
    %p298 = scmp.eq.s32.totalorder %s22, 0
    %p299 = por %p297, %p298
    %p300 = scmp.ne.s32.totalorder %s292, %s294
    %p301 = scmp.eq.s32.totalorder %s27, 1
    %p302 = por %p300, %p301
    %p303 = scmp.ne.s32.totalorder %s294, %s295
    %p304 = scmp.eq.s32.totalorder %s27, 0
    %p305 = por %p303, %p304
    %p306 = scmp.ne.s32.totalorder %s294, %s295
    %p307 = scmp.eq.s32.totalorder %s28, 1
    %p308 = por %p306, %p307
    %p310 = scmp.ne.s32.totalorder %s295, %s309
    %p311 = scmp.eq.s32.totalorder %s28, 0
    %p312 = por %p310, %p311
    %s314 = sadd.s32 %s313, 1
    %p317 = scmp.eq.s32.totalorder %s22, 1
    %p318 = scmp.ne.s32.totalorder %s313, %s315
    %p319 = scmp.eq.s32.totalorder %s22, 0
    %p320 = por %p318, %p319
    %p321 = scmp.ne.s32.totalorder %s313, %s315
    %p322 = scmp.eq.s32.totalorder %s27, 1
    %p323 = por %p321, %p322
    %p324 = scmp.ne.s32.totalorder %s315, %s316
    %p325 = scmp.eq.s32.totalorder %s27, 0
    %p326 = por %p324, %p325
    %p327 = scmp.ne.s32.totalorder %s315, %s316
    %p328 = scmp.eq.s32.totalorder %s28, 1
    %p329 = por %p327, %p328
    %p331 = scmp.ne.s32.totalorder %s316, %s330
    %p332 = scmp.eq.s32.totalorder %s28, 0
    %p333 = por %p331, %p332
    %s334 = ssub.s32 %s22, %s29
    %p335 = scmp.eq.s32.totalorder %s334, 0
    %s337 = sadd.s32 %s336, 1
    %s338 = scalar_select %p335, %s336, %s337
    %p341 = pneg %p335
    %p342 = scmp.eq.s32.totalorder %s22, 1
    %p343 = por %p341, %p342
    %p344 = scmp.ne.s32.totalorder %s336, %s339
    %p345 = scmp.eq.s32.totalorder %s22, 0
    %p346 = por %p344, %p345
    %p347 = scmp.ne.s32.totalorder %s336, %s339
    %p348 = scmp.eq.s32.totalorder %s27, 1
    %p349 = por %p347, %p348
    %p350 = scmp.ne.s32.totalorder %s339, %s340
    %p351 = scmp.eq.s32.totalorder %s27, 0
    %p352 = por %p350, %p351
    %p353 = scmp.ne.s32.totalorder %s339, %s340
    %p354 = scmp.eq.s32.totalorder %s28, 1
    %p355 = por %p353, %p354
    %p357 = scmp.ne.s32.totalorder %s340, %s356
    %p358 = scmp.eq.s32.totalorder %s28, 0
    %p359 = por %p357, %p358
    %p360 = scmp.le.s32.totalorder 1, %s22
    %p361 = scmp.lt.s32.totalorder %s22, 3
    %p362 = pnand %p360, %p361
    %p363 = pneg %p362
    // Predicated region
    $region9: #{tpu_custom_call.1} parent=5 // pred_check
      _
    $region10: #{tpu_custom_call.1} parent=5 // pred_check_branch
      %365 = sbr.rel (%p362) target = $region12
    $region11: #{tpu_custom_call.1} parent=5 // pred_region
      %s366 = ssub.s32 %s22, 1
      // Predicated region
      $region13: #{tpu_custom_call.1} parent=11 // pred_check
        %p367 = pneg %p95
      $region14: #{tpu_custom_call.1} parent=11 // pred_check_branch
        %369 = sbr.rel (%p367) target = $region16
      $region15: #{tpu_custom_call.1} parent=11 // pred_region
        _
      $region16: #{tpu_custom_call.1} parent=11 // pred_fallthru
        _
      // Predicated region
      $region17: #{tpu_custom_call.1} parent=11 // pred_check
        %p370 = pneg %p116
      $region18: #{tpu_custom_call.1} parent=11 // pred_check_branch
        %372 = sbr.rel (%p370) target = $region20
      $region19: #{tpu_custom_call.1} parent=11 // pred_region
        _
      $region20: #{tpu_custom_call.1} parent=11 // pred_fallthru
        _
      // Predicated region
      $region21: #{tpu_custom_call.1} parent=11 // pred_check
        %p373 = pneg %p137
      $region22: #{tpu_custom_call.1} parent=11 // pred_check_branch
        %375 = sbr.rel (%p373) target = $region24
      $region23: #{tpu_custom_call.1} parent=11 // pred_region
        _
      $region24: #{tpu_custom_call.1} parent=11 // pred_fallthru
        _
      // Predicated region
      $region25: #{tpu_custom_call.1} parent=11 // pred_check
        %p376 = pneg %p158
      $region26: #{tpu_custom_call.1} parent=11 // pred_check_branch
        %378 = sbr.rel (%p376) target = $region28
      $region27: #{tpu_custom_call.1} parent=11 // pred_region
        _
      $region28: #{tpu_custom_call.1} parent=11 // pred_fallthru
        _
      // Predicated region
      $region29: #{tpu_custom_call.1} parent=11 // pred_check
        %p379 = pneg %p179
      $region30: #{tpu_custom_call.1} parent=11 // pred_check_branch
        %381 = sbr.rel (%p379) target = $region32
      $region31: #{tpu_custom_call.1} parent=11 // pred_region
        _
      $region32: #{tpu_custom_call.1} parent=11 // pred_fallthru
        _
      // Predicated region
      $region33: #{tpu_custom_call.1} parent=11 // pred_check
        %p382 = pneg %p200
      $region34: #{tpu_custom_call.1} parent=11 // pred_check_branch
        %384 = sbr.rel (%p382) target = $region36
      $region35: #{tpu_custom_call.1} parent=11 // pred_region
        _
      $region36: #{tpu_custom_call.1} parent=11 // pred_fallthru
        _
      // Predicated region
      $region37: #{tpu_custom_call.1} parent=11 // pred_check
        %p385 = pneg %p221
      $region38: #{tpu_custom_call.1} parent=11 // pred_check_branch
        %387 = sbr.rel (%p385) target = $region40
      $region39: #{tpu_custom_call.1} parent=11 // pred_region
        _
      $region40: #{tpu_custom_call.1} parent=11 // pred_fallthru
        _
      // Predicated region
      $region41: #{tpu_custom_call.1} parent=11 // pred_check
        %p388 = pneg %p242
      $region42: #{tpu_custom_call.1} parent=11 // pred_check_branch
        %390 = sbr.rel (%p388) target = $region44
      $region43: #{tpu_custom_call.1} parent=11 // pred_region
        _
      $region44: #{tpu_custom_call.1} parent=11 // pred_fallthru
        _
      // Predicated region
      $region45: #{tpu_custom_call.1} parent=11 // pred_check
        %p391 = pneg %p263
      $region46: #{tpu_custom_call.1} parent=11 // pred_check_branch
        %393 = sbr.rel (%p391) target = $region48
      $region47: #{tpu_custom_call.1} parent=11 // pred_region
        _
      $region48: #{tpu_custom_call.1} parent=11 // pred_fallthru
        _
      // Predicated region
      $region49: #{tpu_custom_call.1} parent=11 // pred_check
        %p394 = pneg %p284
      $region50: #{tpu_custom_call.1} parent=11 // pred_check_branch
        %396 = sbr.rel (%p394) target = $region52
      $region51: #{tpu_custom_call.1} parent=11 // pred_region
        _
      $region52: #{tpu_custom_call.1} parent=11 // pred_fallthru
        _
      // Predicated region
      $region53: #{tpu_custom_call.1} parent=11 // pred_check
        %p397 = pneg %p305
      $region54: #{tpu_custom_call.1} parent=11 // pred_check_branch
        %399 = sbr.rel (%p397) target = $region56
      $region55: #{tpu_custom_call.1} parent=11 // pred_region
        _
      $region56: #{tpu_custom_call.1} parent=11 // pred_fallthru
        _
      // Predicated region
      $region57: #{tpu_custom_call.1} parent=11 // pred_check
        %p400 = pneg %p326
      $region58: #{tpu_custom_call.1} parent=11 // pred_check_branch
        %402 = sbr.rel (%p400) target = $region60
      $region59: #{tpu_custom_call.1} parent=11 // pred_region
        _
      $region60: #{tpu_custom_call.1} parent=11 // pred_fallthru
        _
    $region12: #{tpu_custom_call.1} parent=5 // pred_fallthru
      _
    %p403 = scmp.lt.s32.totalorder %s22, 2
    // Predicated region
    $region61: #{tpu_custom_call.1} parent=5 // pred_check
      %p404 = pneg %p403
    $region62: #{tpu_custom_call.1} parent=5 // pred_check_branch
      %406 = sbr.rel (%p404) target = $region64
    $region63: #{tpu_custom_call.1} parent=5 // pred_region
      // Predicated region
      $region65: #{tpu_custom_call.1} parent=63 // pred_check
        %p407 = pneg %p42
      $region66: #{tpu_custom_call.1} parent=63 // pred_check_branch
        %409 = sbr.rel (%p407) target = $region68
      $region67: #{tpu_custom_call.1} parent=63 // pred_region
        %s410 = smul.u32 19, %s22
        %p411 = scmp.lt.s32.totalorder %s410, 37
        %s412 = scalar_select %p411, %s410, 37
        %s413 = smul.addr %s412, 8
        %s414 = scalar_lea.vmem %s0, %s413
        %s415 = smul.u32 19, %s22
      $region68: #{tpu_custom_call.1} parent=63 // pred_fallthru
        _
      // Predicated region
      $region69: #{tpu_custom_call.1} parent=63 // pred_check
        %p416 = pneg %p68
      $region70: #{tpu_custom_call.1} parent=63 // pred_check_branch
        %418 = sbr.rel (%p416) target = $region72
      $region71: #{tpu_custom_call.1} parent=63 // pred_region
        %s419 = smul.u32 19, %s22
        %p420 = scmp.lt.s32.totalorder %s419, 37
        %s421 = scalar_select %p420, %s419, 37
        %s422 = smul.addr %s421, 8
        %s423 = scalar_lea.vmem %s1, %s422
        %s424 = smul.u32 19, %s22
      $region72: #{tpu_custom_call.1} parent=63 // pred_fallthru
        _
    $region64: #{tpu_custom_call.1} parent=5 // pred_fallthru
      _
    %p425 = scmp.le.s32.totalorder 1, %s22
    %p426 = scmp.lt.s32.totalorder %s22, 3
    %p427 = pnand %p425, %p426
    %p428 = pneg %p427
    // Predicated region
    $region73: #{tpu_custom_call.1} parent=5 // pred_check
      _
    $region74: #{tpu_custom_call.1} parent=5 // pred_check_branch
      %430 = sbr.rel (%p427) target = $region76
    $region75: #{tpu_custom_call.1} parent=5 // pred_region
      %s431 = ssub.s32 %s22, 1
      %s432 = smul.u32 19, %s27
      %p433 = scmp.lt.s32.totalorder %s432, 37
      %s434 = scalar_select %p433, %s432, 37
      %s435 = smul.addr %s434, 8
      %s436 = scalar_lea.vmem %s0, %s435
      %p437 = pneg %p48
      %p438 = pneg %p45
      %s439 = smul.u32 19, %s27
      %p440 = scmp.lt.s32.totalorder %s439, 37
      %s441 = scalar_select %p440, %s439, 37
      %s442 = smul.addr %s441, 8
      %s443 = scalar_lea.vmem %s1, %s442
      %p444 = pneg %p74
      %p445 = pneg %p71
      %p446 = pneg %p95
      %p447 = pneg %p92
      %p448 = pneg %p116
      %p449 = pneg %p113
      %p450 = pneg %p137
      %p451 = pneg %p134
      %p452 = pneg %p158
      %p453 = pneg %p155
      %p454 = pneg %p179
      %p455 = pneg %p176
      %p456 = pneg %p200
      %p457 = pneg %p197
      %p458 = pneg %p221
      %p459 = pneg %p218
      %p460 = pneg %p242
      %p461 = pneg %p239
      %p462 = pneg %p263
      %p463 = pneg %p260
      %p464 = pneg %p284
      %p465 = pneg %p281
      %p466 = pneg %p305
      %p467 = pneg %p302
      %p468 = pneg %p326
      %p469 = pneg %p323
      %p470 = pneg %p352
      %p471 = pneg %p349
      %s472 = smul.u32 19, %s27
      %p473 = scmp.lt.s32.totalorder %s472, 37
      %s474 = scalar_select %p473, %s472, 37
      %s475 = smul.addr %s474, 8
      %s476 = scalar_lea.vmem %s14, %s475
      %s477 = smul.u32 19, %s27
      %p478 = scmp.lt.s32.totalorder %s477, 37
      %s479 = scalar_select %p478, %s477, 37
      %s480 = smul.addr %s479, 8
      %s481 = scalar_lea.vmem %s0, %s480
      %s482 = smul.u32 19, %s27
      %s483 = smul.u32 19, %s27
      %p484 = scmp.lt.s32.totalorder %s483, 37
      %s485 = scalar_select %p484, %s483, 37
      %s486 = smul.addr %s485, 8
      %s487 = scalar_lea.vmem %s1, %s486
      %s488 = smul.u32 19, %s27
      %s489 = smul.u32 19, %s27
      %p490 = scmp.lt.s32.totalorder %s489, 37
      %s491 = scalar_select %p490, %s489, 37
      %s492 = smul.addr %s491, 8
      %s493 = scalar_lea.vmem %s14, %s492
      %s494 = smul.u32 19, %s27
      %v495 = vld [vmem:[%s487] sm:$0xff]
      %v496 = vld [vmem:[%s487 + $0x8] sm:$0xff]
      %v497 = vld [vmem:[%s487 + $0x10] sm:$0xff]
      %v498 = vld [vmem:[%s487 + $0x18] sm:$0xff]
      %v499 = vld [vmem:[%s487 + $0x20] sm:$0xff]
      %v500 = vld [vmem:[%s487 + $0x28] sm:$0xff]
      %v501 = vld [vmem:[%s487 + $0x30] sm:$0xff]
      %v502 = vld [vmem:[%s487 + $0x38] sm:$0xff]
      %v503 = vld [vmem:[%s487 + $0x40] sm:$0xff]
      %v504 = vld [vmem:[%s487 + $0x48] sm:$0xff]
      %v505 = vld [vmem:[%s487 + $0x50] sm:$0xff]
      %v506 = vld [vmem:[%s487 + $0x58] sm:$0xff]
      %v507 = vld [vmem:[%s487 + $0x60] sm:$0xff]
      %v508 = vld [vmem:[%s487 + $0x68] sm:$0xff]
      %v509 = vld [vmem:[%s487 + $0x70] sm:$0xff]
      %v510 = vld [vmem:[%s487 + $0x78] sm:$0xff]
      %v511 = vld [vmem:[%s487 + $0x80] sm:$0xff]
      %v512 = vld [vmem:[%s487 + $0x88] sm:$0xff]
      %v513 = vld [vmem:[%s487 + $0x90] sm:$0xff]
      %v514 = vld [vmem:[%s10] sm:$0xf]
      %v515 = vld [vmem:[%s11] sm:$0x1]
      %v517 = vlaneseq
      %v518 = vshrl.u32 %v517, 7
      %v519 = vsub.s32 0, %v518
      %v520 = vrot.slane %v515, %v519
      %vm522 = vcmask 31744
      %v524 = vsel %vm522, %v495, 0
      %v527 = vsel %vm522, %v496, 0
      %v530 = vsel %vm522, %v497, 0
      %v533 = vsel %vm522, %v498, 0
      %v536 = vsel %vm522, %v499, 0
      %v539 = vsel %vm522, %v500, 0
      %v542 = vsel %vm522, %v501, 0
      %v545 = vsel %vm522, %v502, 0
      %v548 = vsel %vm522, %v503, 0
      %v551 = vsel %vm522, %v504, 0
      %v554 = vsel %vm522, %v505, 0
      %v557 = vsel %vm522, %v506, 0
      %v560 = vsel %vm522, %v507, 0
      %v563 = vsel %vm522, %v508, 0
      %v566 = vsel %vm522, %v509, 0
      %v569 = vsel %vm522, %v510, 0
      %v572 = vsel %vm522, %v511, 0
      %v575 = vsel %vm522, %v512, 0
      %v578 = vsel %vm522, %v513, 0
      %vm580 = vcmask 1043456
      %v582 = vsel %vm580, %v514, 0
      %584 = vmatprep.subr.mxu0 0.0
      %585 = vmatpush1.msra.mxu0 %v582
      %586 = vmatprep.subr.mxu0 0.0
      %587 = vmatpush1.msra.mxu0 0.0
      %588 = vmatprep.subr.mxu0 0.0
      %589 = vmatpush1.msra.mxu0 0.0
      %590 = vmatprep.subr.mxu0 0.0
      %591 = vmatpush1.msra.mxu0 0.0
      %592 = vmatprep.subr.mxu0 0.0
      %593 = vmatpush1.msra.mxu0 0.0
      %594 = vmatprep.subr.mxu0 0.0
      %595 = vmatpush1.msra.mxu0 0.0
      %596 = vmatprep.subr.mxu0 0.0
      %597 = vmatpush1.msra.mxu0 0.0
      %598 = vmatprep.subr.mxu0 0.0
      %599 = vmatpush1.msra.mxu0 0.0
      %600 = vmatprep.subr.mxu0 0.0
      %601 = vmatpush1.msra.mxu0 0.0
      %602 = vmatprep.subr.mxu0 0.0
      %603 = vmatpush1.msra.mxu0 0.0
      %604 = vmatprep.subr.mxu0 0.0
      %605 = vmatpush1.msra.mxu0 0.0
      %606 = vmatprep.subr.mxu0 0.0
      %607 = vmatpush1.msra.mxu0 0.0
      %608 = vmatprep.subr.mxu0 0.0
      %609 = vmatpush1.msra.mxu0 0.0
      %610 = vmatprep.subr.mxu0 0.0
      %611 = vmatpush1.msra.mxu0 0.0
      %612 = vmatprep.subr.mxu0 0.0
      %613 = vmatpush1.msra.mxu0 0.0
      %614 = vmatprep.subr.mxu0 0.0
      %615 = vmatpush1.msra.mxu0 0.0
      %616 = vmatprep.subr.mxu0 0.0
      %617 = vmatpush1.msra.mxu0 0.0
      %618 = vmatprep.subr.mxu0 0.0
      %619 = vmatpush1.msra.mxu0 0.0
      %620 = vmatprep.subr.mxu0 0.0
      %621 = vmatpush1.msra.mxu0 0.0
      %622 = vmatprep.subr.mxu0 0.0
      %623 = vmatpush1.msra.mxu0 0.0
      %624 = vmatprep.subr.mxu0 0.0
      %625 = vmatpush1.msra.mxu0 0.0
      %626 = vmatprep.subr.mxu0 0.0
      %627 = vmatpush1.msra.mxu0 0.0
      %628 = vmatprep.subr.mxu0 0.0
      %629 = vmatpush1.msra.mxu0 0.0
      %630 = vmatprep.subr.mxu0 0.0
      %631 = vmatpush1.msra.mxu0 0.0
      %632 = vmatprep.subr.mxu0 0.0
      %633 = vmatpush1.msra.mxu0 0.0
      %634 = vmatprep.subr.mxu0 0.0
      %635 = vmatpush1.msra.mxu0 0.0
      %636 = vmatprep.subr.mxu0 0.0
      %637 = vmatpush1.msra.mxu0 0.0
      %638 = vmatprep.subr.mxu0 0.0
      %639 = vmatpush1.msra.mxu0 0.0
      %640 = vmatprep.subr.mxu0 0.0
      %641 = vmatpush1.msra.mxu0 0.0
      %642 = vmatprep.subr.mxu0 0.0
      %643 = vmatpush1.msra.mxu0 0.0
      %644 = vmatprep.subr.mxu0 0.0
      %645 = vmatpush1.msra.mxu0 0.0
      %646 = vmatprep.subr.mxu0 0.0
      %647 = vmatpush1.msra.mxu0 0.0
      %648 = vmatprep.mubr.f32.mxu0 0.0
      %649 = vmatmul.mubr.f32.gmra.mrb[0].mxu0 %v524
      %v650 = vpop.f32.mrb[0].mxu0
      %v651 = vadd.f32 %v520, %v650
      %v652 = vpop.f32.mrb[0].mxu0
      %653 = vmatprep.mubr.f32.mxu0 0.0
      %654 = vmatmul.mubr.f32.gmra.mrb[0].mxu0 %v527
      %v655 = vpop.f32.mrb[0].mxu0
      %v656 = vadd.f32 %v520, %v655
      %v657 = vpop.f32.mrb[0].mxu0
      %658 = vmatprep.mubr.f32.mxu0 0.0
      %659 = vmatmul.mubr.f32.gmra.mrb[0].mxu0 %v530
      %v660 = vpop.f32.mrb[0].mxu0
      %v661 = vadd.f32 %v520, %v660
      %v662 = vpop.f32.mrb[0].mxu0
      %663 = vmatprep.mubr.f32.mxu0 0.0
      %664 = vmatmul.mubr.f32.gmra.mrb[0].mxu0 %v533
      %v665 = vpop.f32.mrb[0].mxu0
      %v666 = vadd.f32 %v520, %v665
      %v667 = vpop.f32.mrb[0].mxu0
      %668 = vmatprep.mubr.f32.mxu0 0.0
      %669 = vmatmul.mubr.f32.gmra.mrb[0].mxu0 %v536
      %v670 = vpop.f32.mrb[0].mxu0
      %v671 = vadd.f32 %v520, %v670
      %v672 = vpop.f32.mrb[0].mxu0
      %673 = vmatprep.mubr.f32.mxu0 0.0
      %674 = vmatmul.mubr.f32.gmra.mrb[0].mxu0 %v539
      %v675 = vpop.f32.mrb[0].mxu0
      %v676 = vadd.f32 %v520, %v675
      %v677 = vpop.f32.mrb[0].mxu0
      %678 = vmatprep.mubr.f32.mxu0 0.0
      %679 = vmatmul.mubr.f32.gmra.mrb[0].mxu0 %v542
      %v680 = vpop.f32.mrb[0].mxu0
      %v681 = vadd.f32 %v520, %v680
      %v682 = vpop.f32.mrb[0].mxu0
      %683 = vmatprep.mubr.f32.mxu0 0.0
      %684 = vmatmul.mubr.f32.gmra.mrb[0].mxu0 %v545
      %v685 = vpop.f32.mrb[0].mxu0
      %v686 = vadd.f32 %v520, %v685
      %v687 = vpop.f32.mrb[0].mxu0
      %688 = vmatprep.mubr.f32.mxu0 0.0
      %689 = vmatmul.mubr.f32.gmra.mrb[0].mxu0 %v548
      %v690 = vpop.f32.mrb[0].mxu0
      %v691 = vadd.f32 %v520, %v690
      %v692 = vpop.f32.mrb[0].mxu0
      %693 = vmatprep.mubr.f32.mxu0 0.0
      %694 = vmatmul.mubr.f32.gmra.mrb[0].mxu0 %v551
      %v695 = vpop.f32.mrb[0].mxu0
      %v696 = vadd.f32 %v520, %v695
      %v697 = vpop.f32.mrb[0].mxu0
      %698 = vmatprep.mubr.f32.mxu0 0.0
      %699 = vmatmul.mubr.f32.gmra.mrb[0].mxu0 %v554
      %v700 = vpop.f32.mrb[0].mxu0
      %v701 = vadd.f32 %v520, %v700
      %v702 = vpop.f32.mrb[0].mxu0
      %703 = vmatprep.mubr.f32.mxu0 0.0
      %704 = vmatmul.mubr.f32.gmra.mrb[0].mxu0 %v557
      %v705 = vpop.f32.mrb[0].mxu0
      %v706 = vadd.f32 %v520, %v705
      %v707 = vpop.f32.mrb[0].mxu0
      %708 = vmatprep.mubr.f32.mxu0 0.0
      %709 = vmatmul.mubr.f32.gmra.mrb[0].mxu0 %v560
      %v710 = vpop.f32.mrb[0].mxu0
      %v711 = vadd.f32 %v520, %v710
      %v712 = vpop.f32.mrb[0].mxu0
      %713 = vmatprep.mubr.f32.mxu0 0.0
      %714 = vmatmul.mubr.f32.gmra.mrb[0].mxu0 %v563
      %v715 = vpop.f32.mrb[0].mxu0
      %v716 = vadd.f32 %v520, %v715
      %v717 = vpop.f32.mrb[0].mxu0
      %718 = vmatprep.mubr.f32.mxu0 0.0
      %719 = vmatmul.mubr.f32.gmra.mrb[0].mxu0 %v566
      %v720 = vpop.f32.mrb[0].mxu0
      %v721 = vadd.f32 %v520, %v720
      %v722 = vpop.f32.mrb[0].mxu0
      %723 = vmatprep.mubr.f32.mxu0 0.0
      %724 = vmatmul.mubr.f32.gmra.mrb[0].mxu0 %v569
      %v725 = vpop.f32.mrb[0].mxu0
      %v726 = vadd.f32 %v520, %v725
      %v727 = vpop.f32.mrb[0].mxu0
      %728 = vmatprep.mubr.f32.mxu0 0.0
      %729 = vmatmul.mubr.f32.gmra.mrb[0].mxu0 %v572
      %v730 = vpop.f32.mrb[0].mxu0
      %v731 = vadd.f32 %v520, %v730
      %v732 = vpop.f32.mrb[0].mxu0
      %733 = vmatprep.mubr.f32.mxu0 0.0
      %734 = vmatmul.mubr.f32.gmra.mrb[0].mxu0 %v575
      %v735 = vpop.f32.mrb[0].mxu0
      %v736 = vadd.f32 %v520, %v735
      %v737 = vpop.f32.mrb[0].mxu0
      %738 = vmatprep.mubr.f32.mxu0 0.0
      %739 = vmatmul.mubr.f32.gmra.mrb[0].mxu0 %v578
      %v740 = vpop.f32.mrb[0].mxu0
      %v741 = vadd.f32 %v520, %v740
      %v742 = vpop.f32.mrb[0].mxu0
      %743 = vdwg.mxu0
      %v744 = vld [vmem:[%s481] sm:$0xff]
      %v745 = vld [vmem:[%s481 + $0x8] sm:$0xff]
      %v746 = vld [vmem:[%s481 + $0x10] sm:$0xff]
      %v747 = vld [vmem:[%s481 + $0x18] sm:$0xff]
      %v748 = vld [vmem:[%s481 + $0x20] sm:$0xff]
      %v749 = vld [vmem:[%s481 + $0x28] sm:$0xff]
      %v750 = vld [vmem:[%s481 + $0x30] sm:$0xff]
      %v751 = vld [vmem:[%s481 + $0x38] sm:$0xff]
      %v752 = vld [vmem:[%s481 + $0x40] sm:$0xff]
      %v753 = vld [vmem:[%s481 + $0x48] sm:$0xff]
      %v754 = vld [vmem:[%s481 + $0x50] sm:$0xff]
      %v755 = vld [vmem:[%s481 + $0x58] sm:$0xff]
      %v756 = vld [vmem:[%s481 + $0x60] sm:$0xff]
      %v757 = vld [vmem:[%s481 + $0x68] sm:$0xff]
      %v758 = vld [vmem:[%s481 + $0x70] sm:$0xff]
      %v759 = vld [vmem:[%s481 + $0x78] sm:$0xff]
      %v760 = vld [vmem:[%s481 + $0x80] sm:$0xff]
      %v761 = vld [vmem:[%s481 + $0x88] sm:$0xff]
      %v762 = vld [vmem:[%s481 + $0x90] sm:$0xff]
      %v763 = vld [vmem:[%s2] sm:$0xff]
      %v764 = vld [vmem:[%s2 + $0x8] sm:$0xff]
      %v765 = vld [vmem:[%s3] sm:$0x1]
      %v767 = vlaneseq
      %v768 = vshrl.u32 %v767, 7
      %v769 = vsub.s32 0, %v768
      %v770 = vrot.slane %v765, %v769
      %vm772 = vcmask 130048
      %v774 = vsel %vm772, %v744, 0
      %v777 = vsel %vm772, %v745, 0
      %v780 = vsel %vm772, %v746, 0
      %v783 = vsel %vm772, %v747, 0
      %v786 = vsel %vm772, %v748, 0
      %v789 = vsel %vm772, %v749, 0
      %v792 = vsel %vm772, %v750, 0
      %v795 = vsel %vm772, %v751, 0
      %v798 = vsel %vm772, %v752, 0
      %v801 = vsel %vm772, %v753, 0
      %v804 = vsel %vm772, %v754, 0
      %v807 = vsel %vm772, %v755, 0
      %v810 = vsel %vm772, %v756, 0
      %v813 = vsel %vm772, %v757, 0
      %v816 = vsel %vm772, %v758, 0
      %v819 = vsel %vm772, %v759, 0
      %v822 = vsel %vm772, %v760, 0
      %v825 = vsel %vm772, %v761, 0
      %v828 = vsel %vm772, %v762, 0
      %830 = vmatprep.subr.mxu0 0.0
      %831 = vmatpush1.msra.mxu0 %v763
      %832 = vmatprep.subr.mxu0 0.0
      %833 = vmatpush1.msra.mxu0 %v764
      %834 = vmatprep.subr.mxu0 0.0
      %835 = vmatpush1.msra.mxu0 0.0
      %836 = vmatprep.subr.mxu0 0.0
      %837 = vmatpush1.msra.mxu0 0.0
      %838 = vmatprep.subr.mxu0 0.0
      %839 = vmatpush1.msra.mxu0 0.0
      %840 = vmatprep.subr.mxu0 0.0
      %841 = vmatpush1.msra.mxu0 0.0
      %842 = vmatprep.subr.mxu0 0.0
      %843 = vmatpush1.msra.mxu0 0.0
      %844 = vmatprep.subr.mxu0 0.0
      %845 = vmatpush1.msra.mxu0 0.0
      %846 = vmatprep.subr.mxu0 0.0
      %847 = vmatpush1.msra.mxu0 0.0
      %848 = vmatprep.subr.mxu0 0.0
      %849 = vmatpush1.msra.mxu0 0.0
      %850 = vmatprep.subr.mxu0 0.0
      %851 = vmatpush1.msra.mxu0 0.0
      %852 = vmatprep.subr.mxu0 0.0
      %853 = vmatpush1.msra.mxu0 0.0
      %854 = vmatprep.subr.mxu0 0.0
      %855 = vmatpush1.msra.mxu0 0.0
      %856 = vmatprep.subr.mxu0 0.0
      %857 = vmatpush1.msra.mxu0 0.0
      %858 = vmatprep.subr.mxu0 0.0
      %859 = vmatpush1.msra.mxu0 0.0
      %860 = vmatprep.subr.mxu0 0.0
      %861 = vmatpush1.msra.mxu0 0.0
      %862 = vmatprep.subr.mxu0 0.0
      %863 = vmatpush1.msra.mxu0 0.0
      %864 = vmatprep.subr.mxu0 0.0
      %865 = vmatpush1.msra.mxu0 0.0
      %866 = vmatprep.subr.mxu0 0.0
      %867 = vmatpush1.msra.mxu0 0.0
      %868 = vmatprep.subr.mxu0 0.0
      %869 = vmatpush1.msra.mxu0 0.0
      %870 = vmatprep.subr.mxu0 0.0
      %871 = vmatpush1.msra.mxu0 0.0
      %872 = vmatprep.subr.mxu0 0.0
      %873 = vmatpush1.msra.mxu0 0.0
      %874 = vmatprep.subr.mxu0 0.0
      %875 = vmatpush1.msra.mxu0 0.0
      %876 = vmatprep.subr.mxu0 0.0
      %877 = vmatpush1.msra.mxu0 0.0
      %878 = vmatprep.subr.mxu0 0.0
      %879 = vmatpush1.msra.mxu0 0.0
      %880 = vmatprep.subr.mxu0 0.0
      %881 = vmatpush1.msra.mxu0 0.0
      %882 = vmatprep.subr.mxu0 0.0
      %883 = vmatpush1.msra.mxu0 0.0
      %884 = vmatprep.subr.mxu0 0.0
      %885 = vmatpush1.msra.mxu0 0.0
      %886 = vmatprep.subr.mxu0 0.0
      %887 = vmatpush1.msra.mxu0 0.0
      %888 = vmatprep.subr.mxu0 0.0
      %889 = vmatpush1.msra.mxu0 0.0
      %890 = vmatprep.subr.mxu0 0.0
      %891 = vmatpush1.msra.mxu0 0.0
      %892 = vmatprep.subr.mxu0 0.0
      %893 = vmatpush1.msra.mxu0 0.0
      %894 = vmatprep.mubr.f32.mxu0 0.0
      %895 = vmatmul.mubr.f32.gmra.mrb[0].mxu0 %v774
      %v896 = vpop.f32.mrb[0].mxu0
      %v897 = vadd.f32 %v770, %v896
      %v898 = vpop.f32.mrb[0].mxu0
      %899 = vmatprep.mubr.f32.mxu0 0.0
      %900 = vmatmul.mubr.f32.gmra.mrb[0].mxu0 %v777
      %v901 = vpop.f32.mrb[0].mxu0
      %v902 = vadd.f32 %v770, %v901
      %v903 = vpop.f32.mrb[0].mxu0
      %904 = vmatprep.mubr.f32.mxu0 0.0
      %905 = vmatmul.mubr.f32.gmra.mrb[0].mxu0 %v780
      %v906 = vpop.f32.mrb[0].mxu0
      %v907 = vadd.f32 %v770, %v906
      %v908 = vpop.f32.mrb[0].mxu0
      %909 = vmatprep.mubr.f32.mxu0 0.0
      %910 = vmatmul.mubr.f32.gmra.mrb[0].mxu0 %v783
      %v911 = vpop.f32.mrb[0].mxu0
      %v912 = vadd.f32 %v770, %v911
      %v913 = vpop.f32.mrb[0].mxu0
      %914 = vmatprep.mubr.f32.mxu0 0.0
      %915 = vmatmul.mubr.f32.gmra.mrb[0].mxu0 %v786
      %v916 = vpop.f32.mrb[0].mxu0
      %v917 = vadd.f32 %v770, %v916
      %v918 = vpop.f32.mrb[0].mxu0
      %919 = vmatprep.mubr.f32.mxu0 0.0
      %920 = vmatmul.mubr.f32.gmra.mrb[0].mxu0 %v789
      %v921 = vpop.f32.mrb[0].mxu0
      %v922 = vadd.f32 %v770, %v921
      %v923 = vpop.f32.mrb[0].mxu0
      %924 = vmatprep.mubr.f32.mxu0 0.0
      %925 = vmatmul.mubr.f32.gmra.mrb[0].mxu0 %v792
      %v926 = vpop.f32.mrb[0].mxu0
      %v927 = vadd.f32 %v770, %v926
      %v928 = vpop.f32.mrb[0].mxu0
      %929 = vmatprep.mubr.f32.mxu0 0.0
      %930 = vmatmul.mubr.f32.gmra.mrb[0].mxu0 %v795
      %v931 = vpop.f32.mrb[0].mxu0
      %v932 = vadd.f32 %v770, %v931
      %v933 = vpop.f32.mrb[0].mxu0
      %934 = vmatprep.mubr.f32.mxu0 0.0
      %935 = vmatmul.mubr.f32.gmra.mrb[0].mxu0 %v798
      %v936 = vpop.f32.mrb[0].mxu0
      %v937 = vadd.f32 %v770, %v936
      %v938 = vpop.f32.mrb[0].mxu0
      %939 = vmatprep.mubr.f32.mxu0 0.0
      %940 = vmatmul.mubr.f32.gmra.mrb[0].mxu0 %v801
      %v941 = vpop.f32.mrb[0].mxu0
      %v942 = vadd.f32 %v770, %v941
      %v943 = vpop.f32.mrb[0].mxu0
      %944 = vmatprep.mubr.f32.mxu0 0.0
      %945 = vmatmul.mubr.f32.gmra.mrb[0].mxu0 %v804
      %v946 = vpop.f32.mrb[0].mxu0
      %v947 = vadd.f32 %v770, %v946
      %v948 = vpop.f32.mrb[0].mxu0
      %949 = vmatprep.mubr.f32.mxu0 0.0
      %950 = vmatmul.mubr.f32.gmra.mrb[0].mxu0 %v807
      %v951 = vpop.f32.mrb[0].mxu0
      %v952 = vadd.f32 %v770, %v951
      %v953 = vpop.f32.mrb[0].mxu0
      %954 = vmatprep.mubr.f32.mxu0 0.0
      %955 = vmatmul.mubr.f32.gmra.mrb[0].mxu0 %v810
      %v956 = vpop.f32.mrb[0].mxu0
      %v957 = vadd.f32 %v770, %v956
      %v958 = vpop.f32.mrb[0].mxu0
      %959 = vmatprep.mubr.f32.mxu0 0.0
      %960 = vmatmul.mubr.f32.gmra.mrb[0].mxu0 %v813
      %v961 = vpop.f32.mrb[0].mxu0
      %v962 = vadd.f32 %v770, %v961
      %v963 = vpop.f32.mrb[0].mxu0
      %964 = vmatprep.mubr.f32.mxu0 0.0
      %965 = vmatmul.mubr.f32.gmra.mrb[0].mxu0 %v816
      %v966 = vpop.f32.mrb[0].mxu0
      %v967 = vadd.f32 %v770, %v966
      %v968 = vpop.f32.mrb[0].mxu0
      %969 = vmatprep.mubr.f32.mxu0 0.0
      %970 = vmatmul.mubr.f32.gmra.mrb[0].mxu0 %v819
      %v971 = vpop.f32.mrb[0].mxu0
      %v972 = vadd.f32 %v770, %v971
      %v973 = vpop.f32.mrb[0].mxu0
      %974 = vmatprep.mubr.f32.mxu0 0.0
      %975 = vmatmul.mubr.f32.gmra.mrb[0].mxu0 %v822
      %v976 = vpop.f32.mrb[0].mxu0
      %v977 = vadd.f32 %v770, %v976
      %v978 = vpop.f32.mrb[0].mxu0
      %979 = vmatprep.mubr.f32.mxu0 0.0
      %980 = vmatmul.mubr.f32.gmra.mrb[0].mxu0 %v825
      %v981 = vpop.f32.mrb[0].mxu0
      %v982 = vadd.f32 %v770, %v981
      %v983 = vpop.f32.mrb[0].mxu0
      %984 = vmatprep.mubr.f32.mxu0 0.0
      %985 = vmatmul.mubr.f32.gmra.mrb[0].mxu0 %v828
      %v986 = vpop.f32.mrb[0].mxu0
      %v987 = vadd.f32 %v770, %v986
      %v988 = vpop.f32.mrb[0].mxu0
      %989 = vdwg.mxu0
      %v990 = vld [vmem:[%s4] sm:$0x1]
      %v991 = vld [vmem:[%s5] sm:$0x1]
      %992 = vadd.xlane.f32.xlu0 %v897
      %v993 = vpop.xlane.xlu0 %992
      %994 = vadd.xlane.f32.xlu0 %v902
      %v995 = vpop.xlane.xlu0 %994
      %996 = vadd.xlane.f32.xlu0 %v907
      %v997 = vpop.xlane.xlu0 %996
      %998 = vadd.xlane.f32.xlu0 %v912
      %v999 = vpop.xlane.xlu0 %998
      %1000 = vadd.xlane.f32.xlu0 %v917
      %v1001 = vpop.xlane.xlu0 %1000
      %1002 = vadd.xlane.f32.xlu0 %v922
      %v1003 = vpop.xlane.xlu0 %1002
      %1004 = vadd.xlane.f32.xlu0 %v927
      %v1005 = vpop.xlane.xlu0 %1004
      %1006 = vadd.xlane.f32.xlu0 %v932
      %v1007 = vpop.xlane.xlu0 %1006
      %1008 = vadd.xlane.f32.xlu0 %v937
      %v1009 = vpop.xlane.xlu0 %1008
      %1010 = vadd.xlane.f32.xlu0 %v942
      %v1011 = vpop.xlane.xlu0 %1010
      %1012 = vadd.xlane.f32.xlu0 %v947
      %v1013 = vpop.xlane.xlu0 %1012
      %1014 = vadd.xlane.f32.xlu0 %v952
      %v1015 = vpop.xlane.xlu0 %1014
      %1016 = vadd.xlane.f32.xlu0 %v957
      %v1017 = vpop.xlane.xlu0 %1016
      %1018 = vadd.xlane.f32.xlu0 %v962
      %v1019 = vpop.xlane.xlu0 %1018
      %1020 = vadd.xlane.f32.xlu0 %v967
      %v1021 = vpop.xlane.xlu0 %1020
      %1022 = vadd.xlane.f32.xlu0 %v972
      %v1023 = vpop.xlane.xlu0 %1022
      %1024 = vadd.xlane.f32.xlu0 %v977
      %v1025 = vpop.xlane.xlu0 %1024
      %1026 = vadd.xlane.f32.xlu0 %v982
      %v1027 = vpop.xlane.xlu0 %1026
      %1028 = vadd.xlane.f32.xlu0 %v987
      %v1029 = vpop.xlane.xlu0 %1028
      %v1030 = vmul.f32 %v897, %v897
      %v1031 = vmul.f32 %v902, %v902
      %v1032 = vmul.f32 %v907, %v907
      %v1033 = vmul.f32 %v912, %v912
      %v1034 = vmul.f32 %v917, %v917
      %v1035 = vmul.f32 %v922, %v922
      %v1036 = vmul.f32 %v927, %v927
      %v1037 = vmul.f32 %v932, %v932
      %v1038 = vmul.f32 %v937, %v937
      %v1039 = vmul.f32 %v942, %v942
      %v1040 = vmul.f32 %v947, %v947
      %v1041 = vmul.f32 %v952, %v952
      %v1042 = vmul.f32 %v957, %v957
      %v1043 = vmul.f32 %v962, %v962
      %v1044 = vmul.f32 %v967, %v967
      %v1045 = vmul.f32 %v972, %v972
      %v1046 = vmul.f32 %v977, %v977
      %v1047 = vmul.f32 %v982, %v982
      %v1048 = vmul.f32 %v987, %v987
      %1049 = vadd.xlane.f32.xlu0 %v1030
      %v1050 = vpop.xlane.xlu0 %1049
      %1051 = vadd.xlane.f32.xlu0 %v1031
      %v1052 = vpop.xlane.xlu0 %1051
      %1053 = vadd.xlane.f32.xlu0 %v1032
      %v1054 = vpop.xlane.xlu0 %1053
      %1055 = vadd.xlane.f32.xlu0 %v1033
      %v1056 = vpop.xlane.xlu0 %1055
      %1057 = vadd.xlane.f32.xlu0 %v1034
      %v1058 = vpop.xlane.xlu0 %1057
      %1059 = vadd.xlane.f32.xlu0 %v1035
      %v1060 = vpop.xlane.xlu0 %1059
      %1061 = vadd.xlane.f32.xlu0 %v1036
      %v1062 = vpop.xlane.xlu0 %1061
      %1063 = vadd.xlane.f32.xlu0 %v1037
      %v1064 = vpop.xlane.xlu0 %1063
      %1065 = vadd.xlane.f32.xlu0 %v1038
      %v1066 = vpop.xlane.xlu0 %1065
      %1067 = vadd.xlane.f32.xlu0 %v1039
      %v1068 = vpop.xlane.xlu0 %1067
      %1069 = vadd.xlane.f32.xlu0 %v1040
      %v1070 = vpop.xlane.xlu0 %1069
      %1071 = vadd.xlane.f32.xlu0 %v1041
      %v1072 = vpop.xlane.xlu0 %1071
      %1073 = vadd.xlane.f32.xlu0 %v1042
      %v1074 = vpop.xlane.xlu0 %1073
      %1075 = vadd.xlane.f32.xlu0 %v1043
      %v1076 = vpop.xlane.xlu0 %1075
      %1077 = vadd.xlane.f32.xlu0 %v1044
      %v1078 = vpop.xlane.xlu0 %1077
      %1079 = vadd.xlane.f32.xlu0 %v1045
      %v1080 = vpop.xlane.xlu0 %1079
      %1081 = vadd.xlane.f32.xlu0 %v1046
      %v1082 = vpop.xlane.xlu0 %1081
      %1083 = vadd.xlane.f32.xlu0 %v1047
      %v1084 = vpop.xlane.xlu0 %1083
      %1085 = vadd.xlane.f32.xlu0 %v1048
      %v1086 = vpop.xlane.xlu0 %1085
      %v1087 = vmul.f32 %v993, 0.0078125
      %v1088 = vmul.f32 %v995, 0.0078125
      %v1089 = vmul.f32 %v997, 0.0078125
      %v1090 = vmul.f32 %v999, 0.0078125
      %v1091 = vmul.f32 %v1001, 0.0078125
      %v1092 = vmul.f32 %v1003, 0.0078125
      %v1093 = vmul.f32 %v1005, 0.0078125
      %v1094 = vmul.f32 %v1007, 0.0078125
      %v1095 = vmul.f32 %v1009, 0.0078125
      %v1096 = vmul.f32 %v1011, 0.0078125
      %v1097 = vmul.f32 %v1013, 0.0078125
      %v1098 = vmul.f32 %v1015, 0.0078125
      %v1099 = vmul.f32 %v1017, 0.0078125
      %v1100 = vmul.f32 %v1019, 0.0078125
      %v1101 = vmul.f32 %v1021, 0.0078125
      %v1102 = vmul.f32 %v1023, 0.0078125
      %v1103 = vmul.f32 %v1025, 0.0078125
      %v1104 = vmul.f32 %v1027, 0.0078125
      %v1105 = vmul.f32 %v1029, 0.0078125
      %v1106 = vmul.f32 %v1050, 0.0078125
      %v1107 = vmul.f32 %v1052, 0.0078125
      %v1108 = vmul.f32 %v1054, 0.0078125
      %v1109 = vmul.f32 %v1056, 0.0078125
      %v1110 = vmul.f32 %v1058, 0.0078125
      %v1111 = vmul.f32 %v1060, 0.0078125
      %v1112 = vmul.f32 %v1062, 0.0078125
      %v1113 = vmul.f32 %v1064, 0.0078125
      %v1114 = vmul.f32 %v1066, 0.0078125
      %v1115 = vmul.f32 %v1068, 0.0078125
      %v1116 = vmul.f32 %v1070, 0.0078125
      %v1117 = vmul.f32 %v1072, 0.0078125
      %v1118 = vmul.f32 %v1074, 0.0078125
      %v1119 = vmul.f32 %v1076, 0.0078125
      %v1120 = vmul.f32 %v1078, 0.0078125
      %v1121 = vmul.f32 %v1080, 0.0078125
      %v1122 = vmul.f32 %v1082, 0.0078125
      %v1123 = vmul.f32 %v1084, 0.0078125
      %v1124 = vmul.f32 %v1086, 0.0078125
      %v1125 = vmul.f32 %v1087, %v1087
      %v1126 = vmul.f32 %v1088, %v1088
      %v1127 = vmul.f32 %v1089, %v1089
      %v1128 = vmul.f32 %v1090, %v1090
      %v1129 = vmul.f32 %v1091, %v1091
      %v1130 = vmul.f32 %v1092, %v1092
      %v1131 = vmul.f32 %v1093, %v1093
      %v1132 = vmul.f32 %v1094, %v1094
      %v1133 = vmul.f32 %v1095, %v1095
      %v1134 = vmul.f32 %v1096, %v1096
      %v1135 = vmul.f32 %v1097, %v1097
      %v1136 = vmul.f32 %v1098, %v1098
      %v1137 = vmul.f32 %v1099, %v1099
      %v1138 = vmul.f32 %v1100, %v1100
      %v1139 = vmul.f32 %v1101, %v1101
      %v1140 = vmul.f32 %v1102, %v1102
      %v1141 = vmul.f32 %v1103, %v1103
      %v1142 = vmul.f32 %v1104, %v1104
      %v1143 = vmul.f32 %v1105, %v1105
      %v1144 = vsub.f32 %v1106, %v1125
      %v1145 = vsub.f32 %v1107, %v1126
      %v1146 = vsub.f32 %v1108, %v1127
      %v1147 = vsub.f32 %v1109, %v1128
      %v1148 = vsub.f32 %v1110, %v1129
      %v1149 = vsub.f32 %v1111, %v1130
      %v1150 = vsub.f32 %v1112, %v1131
      %v1151 = vsub.f32 %v1113, %v1132
      %v1152 = vsub.f32 %v1114, %v1133
      %v1153 = vsub.f32 %v1115, %v1134
      %v1154 = vsub.f32 %v1116, %v1135
      %v1155 = vsub.f32 %v1117, %v1136
      %v1156 = vsub.f32 %v1118, %v1137
      %v1157 = vsub.f32 %v1119, %v1138
      %v1158 = vsub.f32 %v1120, %v1139
      %v1159 = vsub.f32 %v1121, %v1140
      %v1160 = vsub.f32 %v1122, %v1141
      %v1161 = vsub.f32 %v1123, %v1142
      %v1162 = vsub.f32 %v1124, %v1143
      %v1163 = vmax.f32 %v1144, 0.0
      %v1164 = vmax.f32 %v1145, 0.0
      %v1165 = vmax.f32 %v1146, 0.0
      %v1166 = vmax.f32 %v1147, 0.0
      %v1167 = vmax.f32 %v1148, 0.0
      %v1168 = vmax.f32 %v1149, 0.0
      %v1169 = vmax.f32 %v1150, 0.0
      %v1170 = vmax.f32 %v1151, 0.0
      %v1171 = vmax.f32 %v1152, 0.0
      %v1172 = vmax.f32 %v1153, 0.0
      %v1173 = vmax.f32 %v1154, 0.0
      %v1174 = vmax.f32 %v1155, 0.0
      %v1175 = vmax.f32 %v1156, 0.0
      %v1176 = vmax.f32 %v1157, 0.0
      %v1177 = vmax.f32 %v1158, 0.0
      %v1178 = vmax.f32 %v1159, 0.0
      %v1179 = vmax.f32 %v1160, 0.0
      %v1180 = vmax.f32 %v1161, 0.0
      %v1181 = vmax.f32 %v1162, 0.0
      %v1182 = vsub.f32 %v897, %v1087
      %v1183 = vsub.f32 %v902, %v1088
      %v1184 = vsub.f32 %v907, %v1089
      %v1185 = vsub.f32 %v912, %v1090
      %v1186 = vsub.f32 %v917, %v1091
      %v1187 = vsub.f32 %v922, %v1092
      %v1188 = vsub.f32 %v927, %v1093
      %v1189 = vsub.f32 %v932, %v1094
      %v1190 = vsub.f32 %v937, %v1095
      %v1191 = vsub.f32 %v942, %v1096
      %v1192 = vsub.f32 %v947, %v1097
      %v1193 = vsub.f32 %v952, %v1098
      %v1194 = vsub.f32 %v957, %v1099
      %v1195 = vsub.f32 %v962, %v1100
      %v1196 = vsub.f32 %v967, %v1101
      %v1197 = vsub.f32 %v972, %v1102
      %v1198 = vsub.f32 %v977, %v1103
      %v1199 = vsub.f32 %v982, %v1104
      %v1200 = vsub.f32 %v987, %v1105
      %v1201 = vadd.f32 %v1163, 1e-05
      %v1202 = vadd.f32 %v1164, 1e-05
      %v1203 = vadd.f32 %v1165, 1e-05
      %v1204 = vadd.f32 %v1166, 1e-05
      %v1205 = vadd.f32 %v1167, 1e-05
      %v1206 = vadd.f32 %v1168, 1e-05
      %v1207 = vadd.f32 %v1169, 1e-05
      %v1208 = vadd.f32 %v1170, 1e-05
      %v1209 = vadd.f32 %v1171, 1e-05
      %v1210 = vadd.f32 %v1172, 1e-05
      %v1211 = vadd.f32 %v1173, 1e-05
      %v1212 = vadd.f32 %v1174, 1e-05
      %v1213 = vadd.f32 %v1175, 1e-05
      %v1214 = vadd.f32 %v1176, 1e-05
      %v1215 = vadd.f32 %v1177, 1e-05
      %v1216 = vadd.f32 %v1178, 1e-05
      %v1217 = vadd.f32 %v1179, 1e-05
      %v1218 = vadd.f32 %v1180, 1e-05
      %v1219 = vadd.f32 %v1181, 1e-05
      %v1220 = vrsqrt.pop %v1201
      %v1221 = vrsqrt.pop %v1202
      %v1222 = vrsqrt.pop %v1203
      %v1223 = vrsqrt.pop %v1204
      %v1224 = vrsqrt.pop %v1205
      %v1225 = vrsqrt.pop %v1206
      %v1226 = vrsqrt.pop %v1207
      %v1227 = vrsqrt.pop %v1208
      %v1228 = vrsqrt.pop %v1209
      %v1229 = vrsqrt.pop %v1210
      %v1230 = vrsqrt.pop %v1211
      %v1231 = vrsqrt.pop %v1212
      %v1232 = vrsqrt.pop %v1213
      %v1233 = vrsqrt.pop %v1214
      %v1234 = vrsqrt.pop %v1215
      %v1235 = vrsqrt.pop %v1216
      %v1236 = vrsqrt.pop %v1217
      %v1237 = vrsqrt.pop %v1218
      %v1238 = vrsqrt.pop %v1219
      %v1239 = vmul.f32 %v1182, %v1220
      %v1240 = vmul.f32 %v1183, %v1221
      %v1241 = vmul.f32 %v1184, %v1222
      %v1242 = vmul.f32 %v1185, %v1223
      %v1243 = vmul.f32 %v1186, %v1224
      %v1244 = vmul.f32 %v1187, %v1225
      %v1245 = vmul.f32 %v1188, %v1226
      %v1246 = vmul.f32 %v1189, %v1227
      %v1247 = vmul.f32 %v1190, %v1228
      %v1248 = vmul.f32 %v1191, %v1229
      %v1249 = vmul.f32 %v1192, %v1230
      %v1250 = vmul.f32 %v1193, %v1231
      %v1251 = vmul.f32 %v1194, %v1232
      %v1252 = vmul.f32 %v1195, %v1233
      %v1253 = vmul.f32 %v1196, %v1234
      %v1254 = vmul.f32 %v1197, %v1235
      %v1255 = vmul.f32 %v1198, %v1236
      %v1256 = vmul.f32 %v1199, %v1237
      %v1257 = vmul.f32 %v1200, %v1238
      %v1259 = vlaneseq
      %v1260 = vshrl.u32 %v1259, 7
      %v1261 = vsub.s32 0, %v1260
      %v1262 = vrot.slane %v990, %v1261
      %v1264 = vmul.f32 %v1239, %v1262
      %v1265 = vmul.f32 %v1240, %v1262
      %v1266 = vmul.f32 %v1241, %v1262
      %v1267 = vmul.f32 %v1242, %v1262
      %v1268 = vmul.f32 %v1243, %v1262
      %v1269 = vmul.f32 %v1244, %v1262
      %v1270 = vmul.f32 %v1245, %v1262
      %v1271 = vmul.f32 %v1246, %v1262
      %v1272 = vmul.f32 %v1247, %v1262
      %v1273 = vmul.f32 %v1248, %v1262
      %v1274 = vmul.f32 %v1249, %v1262
      %v1275 = vmul.f32 %v1250, %v1262
      %v1276 = vmul.f32 %v1251, %v1262
      %v1277 = vmul.f32 %v1252, %v1262
      %v1278 = vmul.f32 %v1253, %v1262
      %v1279 = vmul.f32 %v1254, %v1262
      %v1280 = vmul.f32 %v1255, %v1262
      %v1281 = vmul.f32 %v1256, %v1262
      %v1282 = vmul.f32 %v1257, %v1262
      %v1284 = vlaneseq
      %v1285 = vshrl.u32 %v1284, 7
      %v1286 = vsub.s32 0, %v1285
      %v1287 = vrot.slane %v991, %v1286
      %v1289 = vadd.f32 %v1264, %v1287
      %v1290 = vadd.f32 %v1265, %v1287
      %v1291 = vadd.f32 %v1266, %v1287
      %v1292 = vadd.f32 %v1267, %v1287
      %v1293 = vadd.f32 %v1268, %v1287
      %v1294 = vadd.f32 %v1269, %v1287
      %v1295 = vadd.f32 %v1270, %v1287
      %v1296 = vadd.f32 %v1271, %v1287
      %v1297 = vadd.f32 %v1272, %v1287
      %v1298 = vadd.f32 %v1273, %v1287
      %v1299 = vadd.f32 %v1274, %v1287
      %v1300 = vadd.f32 %v1275, %v1287
      %v1301 = vadd.f32 %v1276, %v1287
      %v1302 = vadd.f32 %v1277, %v1287
      %v1303 = vadd.f32 %v1278, %v1287
      %v1304 = vadd.f32 %v1279, %v1287
      %v1305 = vadd.f32 %v1280, %v1287
      %v1306 = vadd.f32 %v1281, %v1287
      %v1307 = vadd.f32 %v1282, %v1287
      %v1308 = vmax.f32 %v1289, 0.0
      %v1309 = vmax.f32 %v1290, 0.0
      %v1310 = vmax.f32 %v1291, 0.0
      %v1311 = vmax.f32 %v1292, 0.0
      %v1312 = vmax.f32 %v1293, 0.0
      %v1313 = vmax.f32 %v1294, 0.0
      %v1314 = vmax.f32 %v1295, 0.0
      %v1315 = vmax.f32 %v1296, 0.0
      %v1316 = vmax.f32 %v1297, 0.0
      %v1317 = vmax.f32 %v1298, 0.0
      %v1318 = vmax.f32 %v1299, 0.0
      %v1319 = vmax.f32 %v1300, 0.0
      %v1320 = vmax.f32 %v1301, 0.0
      %v1321 = vmax.f32 %v1302, 0.0
      %v1322 = vmax.f32 %v1303, 0.0
      %v1323 = vmax.f32 %v1304, 0.0
      %v1324 = vmax.f32 %v1305, 0.0
      %v1325 = vmax.f32 %v1306, 0.0
      %v1326 = vmax.f32 %v1307, 0.0
      %v1327 = vld [vmem:[%s6] sm:$0xff]
      %v1328 = vld [vmem:[%s6 + $0x8] sm:$0xff]
      %v1329 = vld [vmem:[%s6 + $0x10] sm:$0xff]
      %v1330 = vld [vmem:[%s6 + $0x18] sm:$0xff]
      %v1331 = vld [vmem:[%s6 + $0x20] sm:$0xff]
      %v1332 = vld [vmem:[%s6 + $0x28] sm:$0xff]
      %v1333 = vld [vmem:[%s6 + $0x30] sm:$0xff]
      %v1334 = vld [vmem:[%s6 + $0x38] sm:$0xff]
      %v1335 = vld [vmem:[%s6 + $0x40] sm:$0xff]
      %v1336 = vld [vmem:[%s6 + $0x48] sm:$0xff]
      %v1337 = vld [vmem:[%s6 + $0x50] sm:$0xff]
      %v1338 = vld [vmem:[%s6 + $0x58] sm:$0xff]
      %v1339 = vld [vmem:[%s6 + $0x60] sm:$0xff]
      %v1340 = vld [vmem:[%s6 + $0x68] sm:$0xff]
      %v1341 = vld [vmem:[%s6 + $0x70] sm:$0xff]
      %v1342 = vld [vmem:[%s6 + $0x78] sm:$0xff]
      %v1343 = vld [vmem:[%s7] sm:$0x1]
      %v1345 = vlaneseq
      %v1346 = vshrl.u32 %v1345, 7
      %v1347 = vsub.s32 0, %v1346
      %v1348 = vrot.slane %v1343, %v1347
      %1350 = vmatprep.subr.mxu0 0.0
      %1351 = vmatpush1.msra.mxu0 %v1327
      %1352 = vmatprep.subr.mxu0 0.0
      %1353 = vmatpush1.msra.mxu0 %v1328
      %1354 = vmatprep.subr.mxu0 0.0
      %1355 = vmatpush1.msra.mxu0 %v1329
      %1356 = vmatprep.subr.mxu0 0.0
      %1357 = vmatpush1.msra.mxu0 %v1330
      %1358 = vmatprep.subr.mxu0 0.0
      %1359 = vmatpush1.msra.mxu0 %v1331
      %1360 = vmatprep.subr.mxu0 0.0
      %1361 = vmatpush1.msra.mxu0 %v1332
      %1362 = vmatprep.subr.mxu0 0.0
      %1363 = vmatpush1.msra.mxu0 %v1333
      %1364 = vmatprep.subr.mxu0 0.0
      %1365 = vmatpush1.msra.mxu0 %v1334
      %1366 = vmatprep.subr.mxu0 0.0
      %1367 = vmatpush1.msra.mxu0 %v1335
      %1368 = vmatprep.subr.mxu0 0.0
      %1369 = vmatpush1.msra.mxu0 %v1336
      %1370 = vmatprep.subr.mxu0 0.0
      %1371 = vmatpush1.msra.mxu0 %v1337
      %1372 = vmatprep.subr.mxu0 0.0
      %1373 = vmatpush1.msra.mxu0 %v1338
      %1374 = vmatprep.subr.mxu0 0.0
      %1375 = vmatpush1.msra.mxu0 %v1339
      %1376 = vmatprep.subr.mxu0 0.0
      %1377 = vmatpush1.msra.mxu0 %v1340
      %1378 = vmatprep.subr.mxu0 0.0
      %1379 = vmatpush1.msra.mxu0 %v1341
      %1380 = vmatprep.subr.mxu0 0.0
      %1381 = vmatpush1.msra.mxu0 %v1342
      %1382 = vmatprep.subr.mxu0 0.0
      %1383 = vmatpush1.msra.mxu0 0.0
      %1384 = vmatprep.subr.mxu0 0.0
      %1385 = vmatpush1.msra.mxu0 0.0
      %1386 = vmatprep.subr.mxu0 0.0
      %1387 = vmatpush1.msra.mxu0 0.0
      %1388 = vmatprep.subr.mxu0 0.0
      %1389 = vmatpush1.msra.mxu0 0.0
      %1390 = vmatprep.subr.mxu0 0.0
      %1391 = vmatpush1.msra.mxu0 0.0
      %1392 = vmatprep.subr.mxu0 0.0
      %1393 = vmatpush1.msra.mxu0 0.0
      %1394 = vmatprep.subr.mxu0 0.0
      %1395 = vmatpush1.msra.mxu0 0.0
      %1396 = vmatprep.subr.mxu0 0.0
      %1397 = vmatpush1.msra.mxu0 0.0
      %1398 = vmatprep.subr.mxu0 0.0
      %1399 = vmatpush1.msra.mxu0 0.0
      %1400 = vmatprep.subr.mxu0 0.0
      %1401 = vmatpush1.msra.mxu0 0.0
      %1402 = vmatprep.subr.mxu0 0.0
      %1403 = vmatpush1.msra.mxu0 0.0
      %1404 = vmatprep.subr.mxu0 0.0
      %1405 = vmatpush1.msra.mxu0 0.0
      %1406 = vmatprep.subr.mxu0 0.0
      %1407 = vmatpush1.msra.mxu0 0.0
      %1408 = vmatprep.subr.mxu0 0.0
      %1409 = vmatpush1.msra.mxu0 0.0
      %1410 = vmatprep.subr.mxu0 0.0
      %1411 = vmatpush1.msra.mxu0 0.0
      %1412 = vmatprep.subr.mxu0 0.0
      %1413 = vmatpush1.msra.mxu0 0.0
      %1414 = vmatprep.mubr.f32.mxu0 0.0
      %1415 = vmatmul.mubr.f32.gmra.mrb[0].mxu0 %v1308
      %v1416 = vpop.f32.mrb[0].mxu0
      %v1417 = vadd.f32 %v1348, %v1416
      %v1418 = vpop.f32.mrb[0].mxu0
      %1419 = vmatprep.mubr.f32.mxu0 0.0
      %1420 = vmatmul.mubr.f32.gmra.mrb[0].mxu0 %v1309
      %v1421 = vpop.f32.mrb[0].mxu0
      %v1422 = vadd.f32 %v1348, %v1421
      %v1423 = vpop.f32.mrb[0].mxu0
      %1424 = vmatprep.mubr.f32.mxu0 0.0
      %1425 = vmatmul.mubr.f32.gmra.mrb[0].mxu0 %v1310
      %v1426 = vpop.f32.mrb[0].mxu0
      %v1427 = vadd.f32 %v1348, %v1426
      %v1428 = vpop.f32.mrb[0].mxu0
      %1429 = vmatprep.mubr.f32.mxu0 0.0
      %1430 = vmatmul.mubr.f32.gmra.mrb[0].mxu0 %v1311
      %v1431 = vpop.f32.mrb[0].mxu0
      %v1432 = vadd.f32 %v1348, %v1431
      %v1433 = vpop.f32.mrb[0].mxu0
      %1434 = vmatprep.mubr.f32.mxu0 0.0
      %1435 = vmatmul.mubr.f32.gmra.mrb[0].mxu0 %v1312
      %v1436 = vpop.f32.mrb[0].mxu0
      %v1437 = vadd.f32 %v1348, %v1436
      %v1438 = vpop.f32.mrb[0].mxu0
      %1439 = vmatprep.mubr.f32.mxu0 0.0
      %1440 = vmatmul.mubr.f32.gmra.mrb[0].mxu0 %v1313
      %v1441 = vpop.f32.mrb[0].mxu0
      %v1442 = vadd.f32 %v1348, %v1441
      %v1443 = vpop.f32.mrb[0].mxu0
      %1444 = vmatprep.mubr.f32.mxu0 0.0
      %1445 = vmatmul.mubr.f32.gmra.mrb[0].mxu0 %v1314
      %v1446 = vpop.f32.mrb[0].mxu0
      %v1447 = vadd.f32 %v1348, %v1446
      %v1448 = vpop.f32.mrb[0].mxu0
      %1449 = vmatprep.mubr.f32.mxu0 0.0
      %1450 = vmatmul.mubr.f32.gmra.mrb[0].mxu0 %v1315
      %v1451 = vpop.f32.mrb[0].mxu0
      %v1452 = vadd.f32 %v1348, %v1451
      %v1453 = vpop.f32.mrb[0].mxu0
      %1454 = vmatprep.mubr.f32.mxu0 0.0
      %1455 = vmatmul.mubr.f32.gmra.mrb[0].mxu0 %v1316
      %v1456 = vpop.f32.mrb[0].mxu0
      %v1457 = vadd.f32 %v1348, %v1456
      %v1458 = vpop.f32.mrb[0].mxu0
      %1459 = vmatprep.mubr.f32.mxu0 0.0
      %1460 = vmatmul.mubr.f32.gmra.mrb[0].mxu0 %v1317
      %v1461 = vpop.f32.mrb[0].mxu0
      %v1462 = vadd.f32 %v1348, %v1461
      %v1463 = vpop.f32.mrb[0].mxu0
      %1464 = vmatprep.mubr.f32.mxu0 0.0
      %1465 = vmatmul.mubr.f32.gmra.mrb[0].mxu0 %v1318
      %v1466 = vpop.f32.mrb[0].mxu0
      %v1467 = vadd.f32 %v1348, %v1466
      %v1468 = vpop.f32.mrb[0].mxu0
      %1469 = vmatprep.mubr.f32.mxu0 0.0
      %1470 = vmatmul.mubr.f32.gmra.mrb[0].mxu0 %v1319
      %v1471 = vpop.f32.mrb[0].mxu0
      %v1472 = vadd.f32 %v1348, %v1471
      %v1473 = vpop.f32.mrb[0].mxu0
      %1474 = vmatprep.mubr.f32.mxu0 0.0
      %1475 = vmatmul.mubr.f32.gmra.mrb[0].mxu0 %v1320
      %v1476 = vpop.f32.mrb[0].mxu0
      %v1477 = vadd.f32 %v1348, %v1476
      %v1478 = vpop.f32.mrb[0].mxu0
      %1479 = vmatprep.mubr.f32.mxu0 0.0
      %1480 = vmatmul.mubr.f32.gmra.mrb[0].mxu0 %v1321
      %v1481 = vpop.f32.mrb[0].mxu0
      %v1482 = vadd.f32 %v1348, %v1481
      %v1483 = vpop.f32.mrb[0].mxu0
      %1484 = vmatprep.mubr.f32.mxu0 0.0
      %1485 = vmatmul.mubr.f32.gmra.mrb[0].mxu0 %v1322
      %v1486 = vpop.f32.mrb[0].mxu0
      %v1487 = vadd.f32 %v1348, %v1486
      %v1488 = vpop.f32.mrb[0].mxu0
      %1489 = vmatprep.mubr.f32.mxu0 0.0
      %1490 = vmatmul.mubr.f32.gmra.mrb[0].mxu0 %v1323
      %v1491 = vpop.f32.mrb[0].mxu0
      %v1492 = vadd.f32 %v1348, %v1491
      %v1493 = vpop.f32.mrb[0].mxu0
      %1494 = vmatprep.mubr.f32.mxu0 0.0
      %1495 = vmatmul.mubr.f32.gmra.mrb[0].mxu0 %v1324
      %v1496 = vpop.f32.mrb[0].mxu0
      %v1497 = vadd.f32 %v1348, %v1496
      %v1498 = vpop.f32.mrb[0].mxu0
      %1499 = vmatprep.mubr.f32.mxu0 0.0
      %1500 = vmatmul.mubr.f32.gmra.mrb[0].mxu0 %v1325
      %v1501 = vpop.f32.mrb[0].mxu0
      %v1502 = vadd.f32 %v1348, %v1501
      %v1503 = vpop.f32.mrb[0].mxu0
      %1504 = vmatprep.mubr.f32.mxu0 0.0
      %1505 = vmatmul.mubr.f32.gmra.mrb[0].mxu0 %v1326
      %v1506 = vpop.f32.mrb[0].mxu0
      %v1507 = vadd.f32 %v1348, %v1506
      %v1508 = vpop.f32.mrb[0].mxu0
      %1509 = vdwg.mxu0
      %v1510 = vld [vmem:[%s8] sm:$0x1]
      %v1511 = vld [vmem:[%s9] sm:$0x1]
      %1512 = vadd.xlane.f32.xlu0 %v1417
      %v1513 = vpop.xlane.xlu0 %1512
      %1514 = vadd.xlane.f32.xlu0 %v1422
      %v1515 = vpop.xlane.xlu0 %1514
      %1516 = vadd.xlane.f32.xlu0 %v1427
      %v1517 = vpop.xlane.xlu0 %1516
      %1518 = vadd.xlane.f32.xlu0 %v1432
      %v1519 = vpop.xlane.xlu0 %1518
      %1520 = vadd.xlane.f32.xlu0 %v1437
      %v1521 = vpop.xlane.xlu0 %1520
      %1522 = vadd.xlane.f32.xlu0 %v1442
      %v1523 = vpop.xlane.xlu0 %1522
      %1524 = vadd.xlane.f32.xlu0 %v1447
      %v1525 = vpop.xlane.xlu0 %1524
      %1526 = vadd.xlane.f32.xlu0 %v1452
      %v1527 = vpop.xlane.xlu0 %1526
      %1528 = vadd.xlane.f32.xlu0 %v1457
      %v1529 = vpop.xlane.xlu0 %1528
      %1530 = vadd.xlane.f32.xlu0 %v1462
      %v1531 = vpop.xlane.xlu0 %1530
      %1532 = vadd.xlane.f32.xlu0 %v1467
      %v1533 = vpop.xlane.xlu0 %1532
      %1534 = vadd.xlane.f32.xlu0 %v1472
      %v1535 = vpop.xlane.xlu0 %1534
      %1536 = vadd.xlane.f32.xlu0 %v1477
      %v1537 = vpop.xlane.xlu0 %1536
      %1538 = vadd.xlane.f32.xlu0 %v1482
      %v1539 = vpop.xlane.xlu0 %1538
      %1540 = vadd.xlane.f32.xlu0 %v1487
      %v1541 = vpop.xlane.xlu0 %1540
      %1542 = vadd.xlane.f32.xlu0 %v1492
      %v1543 = vpop.xlane.xlu0 %1542
      %1544 = vadd.xlane.f32.xlu0 %v1497
      %v1545 = vpop.xlane.xlu0 %1544
      %1546 = vadd.xlane.f32.xlu0 %v1502
      %v1547 = vpop.xlane.xlu0 %1546
      %1548 = vadd.xlane.f32.xlu0 %v1507
      %v1549 = vpop.xlane.xlu0 %1548
      %v1550 = vmul.f32 %v1417, %v1417
      %v1551 = vmul.f32 %v1422, %v1422
      %v1552 = vmul.f32 %v1427, %v1427
      %v1553 = vmul.f32 %v1432, %v1432
      %v1554 = vmul.f32 %v1437, %v1437
      %v1555 = vmul.f32 %v1442, %v1442
      %v1556 = vmul.f32 %v1447, %v1447
      %v1557 = vmul.f32 %v1452, %v1452
      %v1558 = vmul.f32 %v1457, %v1457
      %v1559 = vmul.f32 %v1462, %v1462
      %v1560 = vmul.f32 %v1467, %v1467
      %v1561 = vmul.f32 %v1472, %v1472
      %v1562 = vmul.f32 %v1477, %v1477
      %v1563 = vmul.f32 %v1482, %v1482
      %v1564 = vmul.f32 %v1487, %v1487
      %v1565 = vmul.f32 %v1492, %v1492
      %v1566 = vmul.f32 %v1497, %v1497
      %v1567 = vmul.f32 %v1502, %v1502
      %v1568 = vmul.f32 %v1507, %v1507
      %1569 = vadd.xlane.f32.xlu0 %v1550
      %v1570 = vpop.xlane.xlu0 %1569
      %1571 = vadd.xlane.f32.xlu0 %v1551
      %v1572 = vpop.xlane.xlu0 %1571
      %1573 = vadd.xlane.f32.xlu0 %v1552
      %v1574 = vpop.xlane.xlu0 %1573
      %1575 = vadd.xlane.f32.xlu0 %v1553
      %v1576 = vpop.xlane.xlu0 %1575
      %1577 = vadd.xlane.f32.xlu0 %v1554
      %v1578 = vpop.xlane.xlu0 %1577
      %1579 = vadd.xlane.f32.xlu0 %v1555
      %v1580 = vpop.xlane.xlu0 %1579
      %1581 = vadd.xlane.f32.xlu0 %v1556
      %v1582 = vpop.xlane.xlu0 %1581
      %1583 = vadd.xlane.f32.xlu0 %v1557
      %v1584 = vpop.xlane.xlu0 %1583
      %1585 = vadd.xlane.f32.xlu0 %v1558
      %v1586 = vpop.xlane.xlu0 %1585
      %1587 = vadd.xlane.f32.xlu0 %v1559
      %v1588 = vpop.xlane.xlu0 %1587
      %1589 = vadd.xlane.f32.xlu0 %v1560
      %v1590 = vpop.xlane.xlu0 %1589
      %1591 = vadd.xlane.f32.xlu0 %v1561
      %v1592 = vpop.xlane.xlu0 %1591
      %1593 = vadd.xlane.f32.xlu0 %v1562
      %v1594 = vpop.xlane.xlu0 %1593
      %1595 = vadd.xlane.f32.xlu0 %v1563
      %v1596 = vpop.xlane.xlu0 %1595
      %1597 = vadd.xlane.f32.xlu0 %v1564
      %v1598 = vpop.xlane.xlu0 %1597
      %1599 = vadd.xlane.f32.xlu0 %v1565
      %v1600 = vpop.xlane.xlu0 %1599
      %1601 = vadd.xlane.f32.xlu0 %v1566
      %v1602 = vpop.xlane.xlu0 %1601
      %1603 = vadd.xlane.f32.xlu0 %v1567
      %v1604 = vpop.xlane.xlu0 %1603
      %1605 = vadd.xlane.f32.xlu0 %v1568
      %v1606 = vpop.xlane.xlu0 %1605
      %v1607 = vmul.f32 %v1513, 0.0078125
      %v1608 = vmul.f32 %v1515, 0.0078125
      %v1609 = vmul.f32 %v1517, 0.0078125
      %v1610 = vmul.f32 %v1519, 0.0078125
      %v1611 = vmul.f32 %v1521, 0.0078125
      %v1612 = vmul.f32 %v1523, 0.0078125
      %v1613 = vmul.f32 %v1525, 0.0078125
      %v1614 = vmul.f32 %v1527, 0.0078125
      %v1615 = vmul.f32 %v1529, 0.0078125
      %v1616 = vmul.f32 %v1531, 0.0078125
      %v1617 = vmul.f32 %v1533, 0.0078125
      %v1618 = vmul.f32 %v1535, 0.0078125
      %v1619 = vmul.f32 %v1537, 0.0078125
      %v1620 = vmul.f32 %v1539, 0.0078125
      %v1621 = vmul.f32 %v1541, 0.0078125
      %v1622 = vmul.f32 %v1543, 0.0078125
      %v1623 = vmul.f32 %v1545, 0.0078125
      %v1624 = vmul.f32 %v1547, 0.0078125
      %v1625 = vmul.f32 %v1549, 0.0078125
      %v1626 = vmul.f32 %v1570, 0.0078125
      %v1627 = vmul.f32 %v1572, 0.0078125
      %v1628 = vmul.f32 %v1574, 0.0078125
      %v1629 = vmul.f32 %v1576, 0.0078125
      %v1630 = vmul.f32 %v1578, 0.0078125
      %v1631 = vmul.f32 %v1580, 0.0078125
      %v1632 = vmul.f32 %v1582, 0.0078125
      %v1633 = vmul.f32 %v1584, 0.0078125
      %v1634 = vmul.f32 %v1586, 0.0078125
      %v1635 = vmul.f32 %v1588, 0.0078125
      %v1636 = vmul.f32 %v1590, 0.0078125
      %v1637 = vmul.f32 %v1592, 0.0078125
      %v1638 = vmul.f32 %v1594, 0.0078125
      %v1639 = vmul.f32 %v1596, 0.0078125
      %v1640 = vmul.f32 %v1598, 0.0078125
      %v1641 = vmul.f32 %v1600, 0.0078125
      %v1642 = vmul.f32 %v1602, 0.0078125
      %v1643 = vmul.f32 %v1604, 0.0078125
      %v1644 = vmul.f32 %v1606, 0.0078125
      %v1645 = vmul.f32 %v1607, %v1607
      %v1646 = vmul.f32 %v1608, %v1608
      %v1647 = vmul.f32 %v1609, %v1609
      %v1648 = vmul.f32 %v1610, %v1610
      %v1649 = vmul.f32 %v1611, %v1611
      %v1650 = vmul.f32 %v1612, %v1612
      %v1651 = vmul.f32 %v1613, %v1613
      %v1652 = vmul.f32 %v1614, %v1614
      %v1653 = vmul.f32 %v1615, %v1615
      %v1654 = vmul.f32 %v1616, %v1616
      %v1655 = vmul.f32 %v1617, %v1617
      %v1656 = vmul.f32 %v1618, %v1618
      %v1657 = vmul.f32 %v1619, %v1619
      %v1658 = vmul.f32 %v1620, %v1620
      %v1659 = vmul.f32 %v1621, %v1621
      %v1660 = vmul.f32 %v1622, %v1622
      %v1661 = vmul.f32 %v1623, %v1623
      %v1662 = vmul.f32 %v1624, %v1624
      %v1663 = vmul.f32 %v1625, %v1625
      %v1664 = vsub.f32 %v1626, %v1645
      %v1665 = vsub.f32 %v1627, %v1646
      %v1666 = vsub.f32 %v1628, %v1647
      %v1667 = vsub.f32 %v1629, %v1648
      %v1668 = vsub.f32 %v1630, %v1649
      %v1669 = vsub.f32 %v1631, %v1650
      %v1670 = vsub.f32 %v1632, %v1651
      %v1671 = vsub.f32 %v1633, %v1652
      %v1672 = vsub.f32 %v1634, %v1653
      %v1673 = vsub.f32 %v1635, %v1654
      %v1674 = vsub.f32 %v1636, %v1655
      %v1675 = vsub.f32 %v1637, %v1656
      %v1676 = vsub.f32 %v1638, %v1657
      %v1677 = vsub.f32 %v1639, %v1658
      %v1678 = vsub.f32 %v1640, %v1659
      %v1679 = vsub.f32 %v1641, %v1660
      %v1680 = vsub.f32 %v1642, %v1661
      %v1681 = vsub.f32 %v1643, %v1662
      %v1682 = vsub.f32 %v1644, %v1663
      %v1683 = vmax.f32 %v1664, 0.0
      %v1684 = vmax.f32 %v1665, 0.0
      %v1685 = vmax.f32 %v1666, 0.0
      %v1686 = vmax.f32 %v1667, 0.0
      %v1687 = vmax.f32 %v1668, 0.0
      %v1688 = vmax.f32 %v1669, 0.0
      %v1689 = vmax.f32 %v1670, 0.0
      %v1690 = vmax.f32 %v1671, 0.0
      %v1691 = vmax.f32 %v1672, 0.0
      %v1692 = vmax.f32 %v1673, 0.0
      %v1693 = vmax.f32 %v1674, 0.0
      %v1694 = vmax.f32 %v1675, 0.0
      %v1695 = vmax.f32 %v1676, 0.0
      %v1696 = vmax.f32 %v1677, 0.0
      %v1697 = vmax.f32 %v1678, 0.0
      %v1698 = vmax.f32 %v1679, 0.0
      %v1699 = vmax.f32 %v1680, 0.0
      %v1700 = vmax.f32 %v1681, 0.0
      %v1701 = vmax.f32 %v1682, 0.0
      %v1702 = vsub.f32 %v1417, %v1607
      %v1703 = vsub.f32 %v1422, %v1608
      %v1704 = vsub.f32 %v1427, %v1609
      %v1705 = vsub.f32 %v1432, %v1610
      %v1706 = vsub.f32 %v1437, %v1611
      %v1707 = vsub.f32 %v1442, %v1612
      %v1708 = vsub.f32 %v1447, %v1613
      %v1709 = vsub.f32 %v1452, %v1614
      %v1710 = vsub.f32 %v1457, %v1615
      %v1711 = vsub.f32 %v1462, %v1616
      %v1712 = vsub.f32 %v1467, %v1617
      %v1713 = vsub.f32 %v1472, %v1618
      %v1714 = vsub.f32 %v1477, %v1619
      %v1715 = vsub.f32 %v1482, %v1620
      %v1716 = vsub.f32 %v1487, %v1621
      %v1717 = vsub.f32 %v1492, %v1622
      %v1718 = vsub.f32 %v1497, %v1623
      %v1719 = vsub.f32 %v1502, %v1624
      %v1720 = vsub.f32 %v1507, %v1625
      %v1721 = vadd.f32 %v1683, 1e-05
      %v1722 = vadd.f32 %v1684, 1e-05
      %v1723 = vadd.f32 %v1685, 1e-05
      %v1724 = vadd.f32 %v1686, 1e-05
      %v1725 = vadd.f32 %v1687, 1e-05
      %v1726 = vadd.f32 %v1688, 1e-05
      %v1727 = vadd.f32 %v1689, 1e-05
      %v1728 = vadd.f32 %v1690, 1e-05
      %v1729 = vadd.f32 %v1691, 1e-05
      %v1730 = vadd.f32 %v1692, 1e-05
      %v1731 = vadd.f32 %v1693, 1e-05
      %v1732 = vadd.f32 %v1694, 1e-05
      %v1733 = vadd.f32 %v1695, 1e-05
      %v1734 = vadd.f32 %v1696, 1e-05
      %v1735 = vadd.f32 %v1697, 1e-05
      %v1736 = vadd.f32 %v1698, 1e-05
      %v1737 = vadd.f32 %v1699, 1e-05
      %v1738 = vadd.f32 %v1700, 1e-05
      %v1739 = vadd.f32 %v1701, 1e-05
      %v1740 = vrsqrt.pop %v1721
      %v1741 = vrsqrt.pop %v1722
      %v1742 = vrsqrt.pop %v1723
      %v1743 = vrsqrt.pop %v1724
      %v1744 = vrsqrt.pop %v1725
      %v1745 = vrsqrt.pop %v1726
      %v1746 = vrsqrt.pop %v1727
      %v1747 = vrsqrt.pop %v1728
      %v1748 = vrsqrt.pop %v1729
      %v1749 = vrsqrt.pop %v1730
      %v1750 = vrsqrt.pop %v1731
      %v1751 = vrsqrt.pop %v1732
      %v1752 = vrsqrt.pop %v1733
      %v1753 = vrsqrt.pop %v1734
      %v1754 = vrsqrt.pop %v1735
      %v1755 = vrsqrt.pop %v1736
      %v1756 = vrsqrt.pop %v1737
      %v1757 = vrsqrt.pop %v1738
      %v1758 = vrsqrt.pop %v1739
      %v1759 = vmul.f32 %v1702, %v1740
      %v1760 = vmul.f32 %v1703, %v1741
      %v1761 = vmul.f32 %v1704, %v1742
      %v1762 = vmul.f32 %v1705, %v1743
      %v1763 = vmul.f32 %v1706, %v1744
      %v1764 = vmul.f32 %v1707, %v1745
      %v1765 = vmul.f32 %v1708, %v1746
      %v1766 = vmul.f32 %v1709, %v1747
      %v1767 = vmul.f32 %v1710, %v1748
      %v1768 = vmul.f32 %v1711, %v1749
      %v1769 = vmul.f32 %v1712, %v1750
      %v1770 = vmul.f32 %v1713, %v1751
      %v1771 = vmul.f32 %v1714, %v1752
      %v1772 = vmul.f32 %v1715, %v1753
      %v1773 = vmul.f32 %v1716, %v1754
      %v1774 = vmul.f32 %v1717, %v1755
      %v1775 = vmul.f32 %v1718, %v1756
      %v1776 = vmul.f32 %v1719, %v1757
      %v1777 = vmul.f32 %v1720, %v1758
      %v1779 = vlaneseq
      %v1780 = vshrl.u32 %v1779, 7
      %v1781 = vsub.s32 0, %v1780
      %v1782 = vrot.slane %v1510, %v1781
      %v1784 = vmul.f32 %v1759, %v1782
      %v1785 = vmul.f32 %v1760, %v1782
      %v1786 = vmul.f32 %v1761, %v1782
      %v1787 = vmul.f32 %v1762, %v1782
      %v1788 = vmul.f32 %v1763, %v1782
      %v1789 = vmul.f32 %v1764, %v1782
      %v1790 = vmul.f32 %v1765, %v1782
      %v1791 = vmul.f32 %v1766, %v1782
      %v1792 = vmul.f32 %v1767, %v1782
      %v1793 = vmul.f32 %v1768, %v1782
      %v1794 = vmul.f32 %v1769, %v1782
      %v1795 = vmul.f32 %v1770, %v1782
      %v1796 = vmul.f32 %v1771, %v1782
      %v1797 = vmul.f32 %v1772, %v1782
      %v1798 = vmul.f32 %v1773, %v1782
      %v1799 = vmul.f32 %v1774, %v1782
      %v1800 = vmul.f32 %v1775, %v1782
      %v1801 = vmul.f32 %v1776, %v1782
      %v1802 = vmul.f32 %v1777, %v1782
      %v1804 = vlaneseq
      %v1805 = vshrl.u32 %v1804, 7
      %v1806 = vsub.s32 0, %v1805
      %v1807 = vrot.slane %v1511, %v1806
      %v1809 = vadd.f32 %v1784, %v1807
      %v1810 = vadd.f32 %v1785, %v1807
      %v1811 = vadd.f32 %v1786, %v1807
      %v1812 = vadd.f32 %v1787, %v1807
      %v1813 = vadd.f32 %v1788, %v1807
      %v1814 = vadd.f32 %v1789, %v1807
      %v1815 = vadd.f32 %v1790, %v1807
      %v1816 = vadd.f32 %v1791, %v1807
      %v1817 = vadd.f32 %v1792, %v1807
      %v1818 = vadd.f32 %v1793, %v1807
      %v1819 = vadd.f32 %v1794, %v1807
      %v1820 = vadd.f32 %v1795, %v1807
      %v1821 = vadd.f32 %v1796, %v1807
      %v1822 = vadd.f32 %v1797, %v1807
      %v1823 = vadd.f32 %v1798, %v1807
      %v1824 = vadd.f32 %v1799, %v1807
      %v1825 = vadd.f32 %v1800, %v1807
      %v1826 = vadd.f32 %v1801, %v1807
      %v1827 = vadd.f32 %v1802, %v1807
      %v1828 = vadd.f32 %v1809, %v651
      %v1829 = vadd.f32 %v1810, %v656
      %v1830 = vadd.f32 %v1811, %v661
      %v1831 = vadd.f32 %v1812, %v666
      %v1832 = vadd.f32 %v1813, %v671
      %v1833 = vadd.f32 %v1814, %v676
      %v1834 = vadd.f32 %v1815, %v681
      %v1835 = vadd.f32 %v1816, %v686
      %v1836 = vadd.f32 %v1817, %v691
      %v1837 = vadd.f32 %v1818, %v696
      %v1838 = vadd.f32 %v1819, %v701
      %v1839 = vadd.f32 %v1820, %v706
      %v1840 = vadd.f32 %v1821, %v711
      %v1841 = vadd.f32 %v1822, %v716
      %v1842 = vadd.f32 %v1823, %v721
      %v1843 = vadd.f32 %v1824, %v726
      %v1844 = vadd.f32 %v1825, %v731
      %v1845 = vadd.f32 %v1826, %v736
      %v1846 = vadd.f32 %v1827, %v741
      %v1847 = vmax.f32 %v1828, 0.0
      %v1848 = vmax.f32 %v1829, 0.0
      %v1849 = vmax.f32 %v1830, 0.0
      %v1850 = vmax.f32 %v1831, 0.0
      %v1851 = vmax.f32 %v1832, 0.0
      %v1852 = vmax.f32 %v1833, 0.0
      %v1853 = vmax.f32 %v1834, 0.0
      %v1854 = vmax.f32 %v1835, 0.0
      %v1855 = vmax.f32 %v1836, 0.0
      %v1856 = vmax.f32 %v1837, 0.0
      %v1857 = vmax.f32 %v1838, 0.0
      %v1858 = vmax.f32 %v1839, 0.0
      %v1859 = vmax.f32 %v1840, 0.0
      %v1860 = vmax.f32 %v1841, 0.0
      %v1861 = vmax.f32 %v1842, 0.0
      %v1862 = vmax.f32 %v1843, 0.0
      %v1863 = vmax.f32 %v1844, 0.0
      %v1864 = vmax.f32 %v1845, 0.0
      %v1865 = vmax.f32 %v1846, 0.0
      %v1866 = vld [vmem:[%s12] sm:$0xff]
      %v1867 = vld [vmem:[%s12 + $0x8] sm:$0xff]
      %v1868 = vld [vmem:[%s12 + $0x10] sm:$0xff]
      %v1869 = vld [vmem:[%s12 + $0x18] sm:$0xff]
      %v1870 = vld [vmem:[%s12 + $0x20] sm:$0xff]
      %v1871 = vld [vmem:[%s12 + $0x28] sm:$0xff]
      %v1872 = vld [vmem:[%s12 + $0x30] sm:$0xff]
      %v1873 = vld [vmem:[%s12 + $0x38] sm:$0xff]
      %v1874 = vld [vmem:[%s12 + $0x40] sm:$0xff]
      %v1875 = vld [vmem:[%s12 + $0x48] sm:$0xff]
      %v1876 = vld [vmem:[%s12 + $0x50] sm:$0xff]
      %v1877 = vld [vmem:[%s12 + $0x58] sm:$0xff]
      %v1878 = vld [vmem:[%s12 + $0x60] sm:$0xff]
      %v1879 = vld [vmem:[%s12 + $0x68] sm:$0xff]
      %v1880 = vld [vmem:[%s12 + $0x70] sm:$0xff]
      %v1881 = vld [vmem:[%s12 + $0x78] sm:$0xff]
      %v1882 = vld [vmem:[#allocation2] sm:$0x1]
      %v1884 = vlaneseq
      %v1885 = vshrl.u32 %v1884, 7
      %v1886 = vsub.s32 0, %v1885
      %v1887 = vrot.slane %v1882, %v1886
      %1889 = vmatprep.subr.mxu0 0.0
      %1890 = vmatpush1.msra.mxu0 %v1866
      %1891 = vmatprep.subr.mxu0 0.0
      %1892 = vmatpush1.msra.mxu0 %v1867
      %1893 = vmatprep.subr.mxu0 0.0
      %1894 = vmatpush1.msra.mxu0 %v1868
      %1895 = vmatprep.subr.mxu0 0.0
      %1896 = vmatpush1.msra.mxu0 %v1869
      %1897 = vmatprep.subr.mxu0 0.0
      %1898 = vmatpush1.msra.mxu0 %v1870
      %1899 = vmatprep.subr.mxu0 0.0
      %1900 = vmatpush1.msra.mxu0 %v1871
      %1901 = vmatprep.subr.mxu0 0.0
      %1902 = vmatpush1.msra.mxu0 %v1872
      %1903 = vmatprep.subr.mxu0 0.0
      %1904 = vmatpush1.msra.mxu0 %v1873
      %1905 = vmatprep.subr.mxu0 0.0
      %1906 = vmatpush1.msra.mxu0 %v1874
      %1907 = vmatprep.subr.mxu0 0.0
      %1908 = vmatpush1.msra.mxu0 %v1875
      %1909 = vmatprep.subr.mxu0 0.0
      %1910 = vmatpush1.msra.mxu0 %v1876
      %1911 = vmatprep.subr.mxu0 0.0
      %1912 = vmatpush1.msra.mxu0 %v1877
      %1913 = vmatprep.subr.mxu0 0.0
      %1914 = vmatpush1.msra.mxu0 %v1878
      %1915 = vmatprep.subr.mxu0 0.0
      %1916 = vmatpush1.msra.mxu0 %v1879
      %1917 = vmatprep.subr.mxu0 0.0
      %1918 = vmatpush1.msra.mxu0 %v1880
      %1919 = vmatprep.subr.mxu0 0.0
      %1920 = vmatpush1.msra.mxu0 %v1881
      %1921 = vmatprep.subr.mxu0 0.0
      %1922 = vmatpush1.msra.mxu0 0.0
      %1923 = vmatprep.subr.mxu0 0.0
      %1924 = vmatpush1.msra.mxu0 0.0
      %1925 = vmatprep.subr.mxu0 0.0
      %1926 = vmatpush1.msra.mxu0 0.0
      %1927 = vmatprep.subr.mxu0 0.0
      %1928 = vmatpush1.msra.mxu0 0.0
      %1929 = vmatprep.subr.mxu0 0.0
      %1930 = vmatpush1.msra.mxu0 0.0
      %1931 = vmatprep.subr.mxu0 0.0
      %1932 = vmatpush1.msra.mxu0 0.0
      %1933 = vmatprep.subr.mxu0 0.0
      %1934 = vmatpush1.msra.mxu0 0.0
      %1935 = vmatprep.subr.mxu0 0.0
      %1936 = vmatpush1.msra.mxu0 0.0
      %1937 = vmatprep.subr.mxu0 0.0
      %1938 = vmatpush1.msra.mxu0 0.0
      %1939 = vmatprep.subr.mxu0 0.0
      %1940 = vmatpush1.msra.mxu0 0.0
      %1941 = vmatprep.subr.mxu0 0.0
      %1942 = vmatpush1.msra.mxu0 0.0
      %1943 = vmatprep.subr.mxu0 0.0
      %1944 = vmatpush1.msra.mxu0 0.0
      %1945 = vmatprep.subr.mxu0 0.0
      %1946 = vmatpush1.msra.mxu0 0.0
      %1947 = vmatprep.subr.mxu0 0.0
      %1948 = vmatpush1.msra.mxu0 0.0
      %1949 = vmatprep.subr.mxu0 0.0
      %1950 = vmatpush1.msra.mxu0 0.0
      %1951 = vmatprep.subr.mxu0 0.0
      %1952 = vmatpush1.msra.mxu0 0.0
      %1953 = vmatprep.mubr.f32.mxu0 0.0
      %1954 = vmatmul.mubr.f32.gmra.mrb[0].mxu0 %v1847
      %v1955 = vpop.f32.mrb[0].mxu0
      %v1956 = vadd.f32 %v1887, %v1955
      %v1957 = vpop.f32.mrb[0].mxu0
      %1958 = vmatprep.mubr.f32.mxu0 0.0
      %1959 = vmatmul.mubr.f32.gmra.mrb[0].mxu0 %v1848
      %v1960 = vpop.f32.mrb[0].mxu0
      %v1961 = vadd.f32 %v1887, %v1960
      %v1962 = vpop.f32.mrb[0].mxu0
      %1963 = vmatprep.mubr.f32.mxu0 0.0
      %1964 = vmatmul.mubr.f32.gmra.mrb[0].mxu0 %v1849
      %v1965 = vpop.f32.mrb[0].mxu0
      %v1966 = vadd.f32 %v1887, %v1965
      %v1967 = vpop.f32.mrb[0].mxu0
      %1968 = vmatprep.mubr.f32.mxu0 0.0
      %1969 = vmatmul.mubr.f32.gmra.mrb[0].mxu0 %v1850
      %v1970 = vpop.f32.mrb[0].mxu0
      %v1971 = vadd.f32 %v1887, %v1970
      %v1972 = vpop.f32.mrb[0].mxu0
      %1973 = vmatprep.mubr.f32.mxu0 0.0
      %1974 = vmatmul.mubr.f32.gmra.mrb[0].mxu0 %v1851
      %v1975 = vpop.f32.mrb[0].mxu0
      %v1976 = vadd.f32 %v1887, %v1975
      %v1977 = vpop.f32.mrb[0].mxu0
      %1978 = vmatprep.mubr.f32.mxu0 0.0
      %1979 = vmatmul.mubr.f32.gmra.mrb[0].mxu0 %v1852
      %v1980 = vpop.f32.mrb[0].mxu0
      %v1981 = vadd.f32 %v1887, %v1980
      %v1982 = vpop.f32.mrb[0].mxu0
      %1983 = vmatprep.mubr.f32.mxu0 0.0
      %1984 = vmatmul.mubr.f32.gmra.mrb[0].mxu0 %v1853
      %v1985 = vpop.f32.mrb[0].mxu0
      %v1986 = vadd.f32 %v1887, %v1985
      %v1987 = vpop.f32.mrb[0].mxu0
      %1988 = vmatprep.mubr.f32.mxu0 0.0
      %1989 = vmatmul.mubr.f32.gmra.mrb[0].mxu0 %v1854
      %v1990 = vpop.f32.mrb[0].mxu0
      %v1991 = vadd.f32 %v1887, %v1990
      %v1992 = vpop.f32.mrb[0].mxu0
      %1993 = vmatprep.mubr.f32.mxu0 0.0
      %1994 = vmatmul.mubr.f32.gmra.mrb[0].mxu0 %v1855
      %v1995 = vpop.f32.mrb[0].mxu0
      %v1996 = vadd.f32 %v1887, %v1995
      %v1997 = vpop.f32.mrb[0].mxu0
      %1998 = vmatprep.mubr.f32.mxu0 0.0
      %1999 = vmatmul.mubr.f32.gmra.mrb[0].mxu0 %v1856
      %v2000 = vpop.f32.mrb[0].mxu0
      %v2001 = vadd.f32 %v1887, %v2000
      %v2002 = vpop.f32.mrb[0].mxu0
      %2003 = vmatprep.mubr.f32.mxu0 0.0
      %2004 = vmatmul.mubr.f32.gmra.mrb[0].mxu0 %v1857
      %v2005 = vpop.f32.mrb[0].mxu0
      %v2006 = vadd.f32 %v1887, %v2005
      %v2007 = vpop.f32.mrb[0].mxu0
      %2008 = vmatprep.mubr.f32.mxu0 0.0
      %2009 = vmatmul.mubr.f32.gmra.mrb[0].mxu0 %v1858
      %v2010 = vpop.f32.mrb[0].mxu0
      %v2011 = vadd.f32 %v1887, %v2010
      %v2012 = vpop.f32.mrb[0].mxu0
      %2013 = vmatprep.mubr.f32.mxu0 0.0
      %2014 = vmatmul.mubr.f32.gmra.mrb[0].mxu0 %v1859
      %v2015 = vpop.f32.mrb[0].mxu0
      %v2016 = vadd.f32 %v1887, %v2015
      %v2017 = vpop.f32.mrb[0].mxu0
      %2018 = vmatprep.mubr.f32.mxu0 0.0
      %2019 = vmatmul.mubr.f32.gmra.mrb[0].mxu0 %v1860
      %v2020 = vpop.f32.mrb[0].mxu0
      %v2021 = vadd.f32 %v1887, %v2020
      %v2022 = vpop.f32.mrb[0].mxu0
      %2023 = vmatprep.mubr.f32.mxu0 0.0
      %2024 = vmatmul.mubr.f32.gmra.mrb[0].mxu0 %v1861
      %v2025 = vpop.f32.mrb[0].mxu0
      %v2026 = vadd.f32 %v1887, %v2025
      %v2027 = vpop.f32.mrb[0].mxu0
      %2028 = vmatprep.mubr.f32.mxu0 0.0
      %2029 = vmatmul.mubr.f32.gmra.mrb[0].mxu0 %v1862
      %v2030 = vpop.f32.mrb[0].mxu0
      %v2031 = vadd.f32 %v1887, %v2030
      %v2032 = vpop.f32.mrb[0].mxu0
      %2033 = vmatprep.mubr.f32.mxu0 0.0
      %2034 = vmatmul.mubr.f32.gmra.mrb[0].mxu0 %v1863
      %v2035 = vpop.f32.mrb[0].mxu0
      %v2036 = vadd.f32 %v1887, %v2035
      %v2037 = vpop.f32.mrb[0].mxu0
      %2038 = vmatprep.mubr.f32.mxu0 0.0
      %2039 = vmatmul.mubr.f32.gmra.mrb[0].mxu0 %v1864
      %v2040 = vpop.f32.mrb[0].mxu0
      %v2041 = vadd.f32 %v1887, %v2040
      %v2042 = vpop.f32.mrb[0].mxu0
      %2043 = vmatprep.mubr.f32.mxu0 0.0
      %2044 = vmatmul.mubr.f32.gmra.mrb[0].mxu0 %v1865
      %v2045 = vpop.f32.mrb[0].mxu0
      %v2046 = vadd.f32 %v1887, %v2045
      %v2047 = vpop.f32.mrb[0].mxu0
      %2048 = vdwg.mxu0
      %vm2049 = vcmask 7168
      %2050 = vst.msk [vmem:[%s493] sm:$0xff] %vm2049, %v1956
      %2051 = vst.msk [vmem:[%s493 + $0x8] sm:$0xff] %vm2049, %v1961
      %2052 = vst.msk [vmem:[%s493 + $0x10] sm:$0xff] %vm2049, %v1966
      %2053 = vst.msk [vmem:[%s493 + $0x18] sm:$0xff] %vm2049, %v1971
      %2054 = vst.msk [vmem:[%s493 + $0x20] sm:$0xff] %vm2049, %v1976
      %2055 = vst.msk [vmem:[%s493 + $0x28] sm:$0xff] %vm2049, %v1981
      %2056 = vst.msk [vmem:[%s493 + $0x30] sm:$0xff] %vm2049, %v1986
      %2057 = vst.msk [vmem:[%s493 + $0x38] sm:$0xff] %vm2049, %v1991
      %2058 = vst.msk [vmem:[%s493 + $0x40] sm:$0xff] %vm2049, %v1996
      %2059 = vst.msk [vmem:[%s493 + $0x48] sm:$0xff] %vm2049, %v2001
      %2060 = vst.msk [vmem:[%s493 + $0x50] sm:$0xff] %vm2049, %v2006
      %2061 = vst.msk [vmem:[%s493 + $0x58] sm:$0xff] %vm2049, %v2011
      %2062 = vst.msk [vmem:[%s493 + $0x60] sm:$0xff] %vm2049, %v2016
      %2063 = vst.msk [vmem:[%s493 + $0x68] sm:$0xff] %vm2049, %v2021
      %2064 = vst.msk [vmem:[%s493 + $0x70] sm:$0xff] %vm2049, %v2026
      %2065 = vst.msk [vmem:[%s493 + $0x78] sm:$0xff] %vm2049, %v2031
      %2066 = vst.msk [vmem:[%s493 + $0x80] sm:$0xff] %vm2049, %v2036
      %2067 = vst.msk [vmem:[%s493 + $0x88] sm:$0xff] %vm2049, %v2041
      %2068 = vst.msk [vmem:[%s493 + $0x90] sm:$0xff] %vm2049, %v2046
      %s2069 = smul.u32 19, %s27
      %p2070 = scmp.lt.s32.totalorder %s2069, 37
      %s2071 = scalar_select %p2070, %s2069, 37
      %s2072 = smul.addr %s2071, 8
      %s2073 = scalar_lea.vmem %s14, %s2072
      // Predicated region
      $region77: #{tpu_custom_call.1} parent=75 // pred_check
        %p2074 = pneg %p349
      $region78: #{tpu_custom_call.1} parent=75 // pred_check_branch
        %2076 = sbr.rel (%p2074) target = $region80
      $region79: #{tpu_custom_call.1} parent=75 // pred_region
        %s2077 = smul.u32 19, %s27
      $region80: #{tpu_custom_call.1} parent=75 // pred_fallthru
        _
    $region76: #{tpu_custom_call.1} parent=5 // pred_fallthru
      _
    %p2078 = scmp.le.s32.totalorder 2, %s22
    // Predicated region
    $region81: #{tpu_custom_call.1} parent=5 // pred_check
      %p2079 = pneg %p2078
    $region82: #{tpu_custom_call.1} parent=5 // pred_check_branch
      %2081 = sbr.rel (%p2079) target = $region84
    $region83: #{tpu_custom_call.1} parent=5 // pred_region
      %s2082 = ssub.s32 %s22, 2
      // Predicated region
      $region85: #{tpu_custom_call.1} parent=83 // pred_check
        %p2083 = pneg %p355
      $region86: #{tpu_custom_call.1} parent=83 // pred_check_branch
        %2085 = sbr.rel (%p2083) target = $region88
      $region87: #{tpu_custom_call.1} parent=83 // pred_region
        %s2086 = smul.u32 19, %s28
        %p2087 = scmp.lt.s32.totalorder %s2086, 37
        %s2088 = scalar_select %p2087, %s2086, 37
        %s2089 = smul.addr %s2088, 8
        %s2090 = scalar_lea.vmem %s14, %s2089
      $region88: #{tpu_custom_call.1} parent=83 // pred_fallthru
        _
    $region84: #{tpu_custom_call.1} parent=5 // pred_fallthru
      _
  $region6: #{tpu_custom_call.1} parent=0 // loop_footer
    %s26 = sadd.s32 1, %s22
  $region7: #{tpu_custom_call.1} parent=0 // loop_footer_branch
    %21 = sbr.rel target = $region3
  $region8: #{tpu_custom_call.1} parent=0 // loop_exit
    _

</llo_original>
